<compile_context>
chip_gen: v5e
topology: v5e:2x2
jax: 0.10.0
libtpu: 0.0.40
codegen_flags: <defaults>
</compile_context>

<pallas_src>
import functools
import math

import jax
import jax.numpy as jnp
import numpy as np
from jax.experimental import pallas as pl
from jax.experimental.pallas import tpu as pltpu

# ---------------- model hyperparams (small, deterministic) ----------------
N = 2          # batch
S = 8          # seq_len (same for x / value / key here)
E = 32         # embed_size
H = 4          # heads
HD = E // H    # head_dim
FE = 2         # forward_expansion
HIDDEN = FE * E
EPS = 1e-5


# ---------------------------- fused Pallas kernel --------------------------
def _layernorm(z, g, b, eps):
    mu = jnp.mean(z, axis=-1, keepdims=True)
    var = jnp.mean((z - mu) ** 2, axis=-1, keepdims=True)
    return (z - mu) * jax.lax.rsqrt(var + eps) * g + b


def decoder_block_kernel(
    x_ref, val_ref, key_ref, tgt_bias_ref, src_bias_ref,
    wq1_ref, wk1_ref, wv1_ref, fc1_w_ref, fc1_b_ref, ng_ref, nb_ref,
    wq2_ref, wk2_ref, wv2_ref, fc2_w_ref, fc2_b_ref, n1g_ref, n1b_ref,
    ff1_w_ref, ff1_b_ref, ff2_w_ref, ff2_b_ref, n2g_ref, n2b_ref,
    o_ref, *, scale, eps, heads, head_dim):
    """One batch element of the full decoder block, entirely in VMEM."""
    x = x_ref[...]          # (S, E)
    enc_v = val_ref[...]    # (S, E)
    enc_k = key_ref[...]    # (S, E)

    def mha_fc(q_in, k_in, v_in, wq_ref, wk_ref, wv_ref, fcw_ref, fcb_ref, bias):
        # Block-diagonal per-head projections → lane-dense (S,E)@(E,E) matmuls.
        q = jnp.dot(q_in, wq_ref[...], preferred_element_type=jnp.float32)
        k = jnp.dot(k_in, wk_ref[...], preferred_element_type=jnp.float32)
        v = jnp.dot(v_in, wv_ref[...], preferred_element_type=jnp.float32)
        fcw = fcw_ref[...]  # (E, E) pre-transposed (in, out)
        out = jnp.zeros((q.shape[0], fcw.shape[1]), jnp.float32)
        # Unrolled head loop; fc_out is accumulated per head so the per-head
        # context stays in vregs (no concat, no HBM).
        for h in range(heads):
            lo, hi = h * head_dim, (h + 1) * head_dim
            qh, kh, vh = q[:, lo:hi], k[:, lo:hi], v[:, lo:hi]
            # energy_h = q_h @ k_h^T without an explicit transpose
            energy = jax.lax.dot_general(
                qh, kh, (((1,), (1,)), ((), ())),
                preferred_element_type=jnp.float32)          # (Sq, Sk)
            logits = (energy + bias) * scale                 # mask then /sqrt(E), as in ref
            m = jnp.max(logits, axis=-1, keepdims=True)
            p = jnp.exp(logits - m)
            attn = p * pl.reciprocal(jnp.sum(p, axis=-1, keepdims=True),
                                     approx=False)
            ctx_h = jnp.dot(attn, vh, preferred_element_type=jnp.float32)  # (Sq, HD)
            out = out + jnp.dot(ctx_h, fcw[lo:hi, :],
                                preferred_element_type=jnp.float32)
        return out + fcb_ref[...]

    # --- masked self-attention + fc_out + residual + LayerNorm ---
    a1 = mha_fc(x, x, x, wq1_ref, wk1_ref, wv1_ref,
                fc1_w_ref, fc1_b_ref, tgt_bias_ref[...])
    query = _layernorm(a1 + x, ng_ref[...], nb_ref[...], eps)

    # --- cross-attention (TransformerBlock) + fc_out + residual + LayerNorm ---
    a2 = mha_fc(query, enc_k, enc_v, wq2_ref, wk2_ref, wv2_ref,
                fc2_w_ref, fc2_b_ref, src_bias_ref[...])
    x2 = _layernorm(a2 + query, n1g_ref[...], n1b_ref[...], eps)

    # --- feed-forward + residual + LayerNorm ---
    hdn = jnp.dot(x2, ff1_w_ref[...], preferred_element_type=jnp.float32) + ff1_b_ref[...]
    hdn = jnp.maximum(hdn, 0.0)
    ff = jnp.dot(hdn, ff2_w_ref[...], preferred_element_type=jnp.float32) + ff2_b_ref[...]
    o_ref[...] = _layernorm(ff + x2, n2g_ref[...], n2b_ref[...], eps)


# ------------------------------ wrapper -------------------------------------
def decoder_block(x, value, key, src_mask, tgt_mask, p):
    """Pallas implementation of DecoderBlock.forward (dropout = identity)."""
    n, s, e = x.shape
    hid = p["ff1_w"].shape[0]

    # Per-head (HD,HD) Linear (no bias, shared across heads) → block-diagonal (E,E),
    # already transposed so the kernel computes x @ W.
    eye = jnp.eye(H, dtype=jnp.float32)
    bd = lambda w: jnp.kron(eye, w.T)
    wq1, wk1, wv1 = bd(p["wq1"]), bd(p["wk1"]), bd(p["wv1"])
    wq2, wk2, wv2 = bd(p["wq2"]), bd(p["wk2"]), bd(p["wv2"])

    # Masks as additive biases, computed once outside the kernel.
    tgt_bias = jnp.where(tgt_mask == 0, jnp.float32(-1e12), jnp.float32(0.0))
    src_bias = jnp.where(src_mask == 0, jnp.float32(-1e12), jnp.float32(0.0))

    kernel = functools.partial(decoder_block_kernel, scale=1.0 / math.sqrt(e),
                               eps=EPS, heads=H, head_dim=HD)

    act = pl.BlockSpec((None, s, e), lambda b: (b, 0, 0))        # per-batch tile
    const = lambda r, c: pl.BlockSpec((r, c), lambda b: (0, 0))  # broadcast operand

    return pl.pallas_call(
        kernel,
        out_shape=jax.ShapeDtypeStruct((n, s, e), jnp.float32),
        grid=(n,),
        in_specs=[
            act, act, act,                    # x, value, key
            const(s, s), const(s, s),         # tgt_bias, src_bias
            const(e, e), const(e, e), const(e, e),          # wq1, wk1, wv1 (block-diag)
            const(e, e), const(1, e), const(1, e), const(1, e),   # fc1_wT, fc1_b, norm_g, norm_b
            const(e, e), const(e, e), const(e, e),          # wq2, wk2, wv2
            const(e, e), const(1, e), const(1, e), const(1, e),   # fc2_wT, fc2_b, norm1_g, norm1_b
            const(e, hid), const(1, hid), const(hid, e), const(1, e),  # ff1_wT, ff1_b, ff2_wT, ff2_b
            const(1, e), const(1, e),                       # norm2_g, norm2_b
        ],
        out_specs=act,
        compiler_params=pltpu.CompilerParams(
            dimension_semantics=("parallel",)),   # batch across TCs on v7x
    )(x, value, key, tgt_bias, src_bias,
      wq1, wk1, wv1, p["fc1_w"].T, p["fc1_b"].reshape(1, e),
      p["norm_g"].reshape(1, e), p["norm_b"].reshape(1, e),
      wq2, wk2, wv2, p["fc2_w"].T, p["fc2_b"].reshape(1, e),
      p["norm1_g"].reshape(1, e), p["norm1_b"].reshape(1, e),
      p["ff1_w"].T, p["ff1_b"].reshape(1, hid), p["ff2_w"].T,
      p["ff2_b"].reshape(1, e),
      p["norm2_g"].reshape(1, e), p["norm2_b"].reshape(1, e))


# ------------------------- plain-JAX reference ------------------------------
def ref_self_attention(values, keys, queries, mask, wv, wk, wq, fcw, fcb):
    n, lq, e = queries.shape
    lk = keys.shape[1]
    lv = values.shape[1]
    vr = values.reshape(n, lv, H, HD) @ wv.T
    kr = keys.reshape(n, lk, H, HD) @ wk.T
    qr = queries.reshape(n, lq, H, HD) @ wq.T
    energy = jnp.einsum("nqhd,nkhd->nhqk", qr, kr)
    energy = jnp.where(mask == 0, -1e12, energy)
    attn = jax.nn.softmax(energy / math.sqrt(e), axis=3)
    out = jnp.einsum("nhql,nlhd->nqhd", attn, vr).reshape(n, lq, e)
    return out @ fcw.T + fcb


def ref_ln(x, g, b, eps=EPS):
    mu = x.mean(-1, keepdims=True)
    var = ((x - mu) ** 2).mean(-1, keepdims=True)
    return (x - mu) / jnp.sqrt(var + eps) * g + b


def ref_decoder_block(x, value, key, src_mask, tgt_mask, p):
    attn1 = ref_self_attention(x, x, x, tgt_mask, p["wv1"], p["wk1"], p["wq1"],
                               p["fc1_w"], p["fc1_b"])
    query = ref_ln(attn1 + x, p["norm_g"], p["norm_b"])
    attn2 = ref_self_attention(value, key, query, src_mask, p["wv2"], p["wk2"],
                               p["wq2"], p["fc2_w"], p["fc2_b"])
    x2 = ref_ln(attn2 + query, p["norm1_g"], p["norm1_b"])
    h = jnp.maximum(x2 @ p["ff1_w"].T + p["ff1_b"], 0.0)
    ff = h @ p["ff2_w"].T + p["ff2_b"]
    return ref_ln(ff + x2, p["norm2_g"], p["norm2_b"])


# ------------------------------- main ---------------------------------------
if __name__ == "__main__":
    root = jax.random.PRNGKey(0)
    keys = jax.random.split(root, 16)

    def w(k, shape, scale=0.1):
        return (scale * jax.random.normal(k, shape)).astype(jnp.float32)

    params = {
        # decoder self-attention
        "wv1": w(keys[0], (HD, HD)), "wk1": w(keys[1], (HD, HD)),
        "wq1": w(keys[2], (HD, HD)),
        "fc1_w": w(keys[3], (E, E)), "fc1_b": w(keys[4], (E,)),
        "norm_g": jnp.ones((E,), jnp.float32),
        "norm_b": jnp.zeros((E,), jnp.float32),
        # transformer-block attention
        "wv2": w(keys[5], (HD, HD)), "wk2": w(keys[6], (HD, HD)),
        "wq2": w(keys[7], (HD, HD)),
        "fc2_w": w(keys[8], (E, E)), "fc2_b": w(keys[9], (E,)),
        "norm1_g": jnp.ones((E,), jnp.float32),
        "norm1_b": jnp.zeros((E,), jnp.float32),
        # feed-forward
        "ff1_w": w(keys[10], (HIDDEN, E)), "ff1_b": w(keys[11], (HIDDEN,)),
        "ff2_w": w(keys[12], (E, HIDDEN)), "ff2_b": w(keys[13], (E,)),
        "norm2_g": jnp.ones((E,), jnp.float32),
        "norm2_b": jnp.zeros((E,), jnp.float32),
    }

    x = jax.random.normal(keys[14], (N, S, E), jnp.float32)
    enc = jax.random.normal(keys[15], (N, S, E), jnp.float32)
    value, key = enc, enc  # encoder output plays value & key

    # masks broadcast over (batch, head): target = causal, source = all ones
    tgt_mask = jnp.tril(jnp.ones((S, S), jnp.float32))
    src_mask = jnp.ones((S, S), jnp.float32)

    out = decoder_block(x, value, key, src_mask, tgt_mask, params)
    out = jax.block_until_ready(out)

    ref = ref_decoder_block(x, value, key, src_mask, tgt_mask, params)
    np.testing.assert_allclose(np.asarray(out), np.asarray(ref),
                               rtol=1e-4, atol=1e-4)
    print("KERNEL_OK")
</pallas_src>

<mosaic_0001>
module attributes {stable_mosaic.version = 11 : i64} {
  func.func @decoder_block_kernel(%arg0: i32, %arg1: memref<1x8x32xf32, #tpu.memory_space<vmem>>, %arg2: memref<1x8x32xf32, #tpu.memory_space<vmem>>, %arg3: memref<1x8x32xf32, #tpu.memory_space<vmem>>, %arg4: memref<8x8xf32, #tpu.memory_space<vmem>>, %arg5: memref<8x8xf32, #tpu.memory_space<vmem>>, %arg6: memref<32x32xf32, #tpu.memory_space<vmem>>, %arg7: memref<32x32xf32, #tpu.memory_space<vmem>>, %arg8: memref<32x32xf32, #tpu.memory_space<vmem>>, %arg9: memref<32x32xf32, #tpu.memory_space<vmem>>, %arg10: memref<1x32xf32, #tpu.memory_space<vmem>>, %arg11: memref<1x32xf32, #tpu.memory_space<vmem>>, %arg12: memref<1x32xf32, #tpu.memory_space<vmem>>, %arg13: memref<32x32xf32, #tpu.memory_space<vmem>>, %arg14: memref<32x32xf32, #tpu.memory_space<vmem>>, %arg15: memref<32x32xf32, #tpu.memory_space<vmem>>, %arg16: memref<32x32xf32, #tpu.memory_space<vmem>>, %arg17: memref<1x32xf32, #tpu.memory_space<vmem>>, %arg18: memref<1x32xf32, #tpu.memory_space<vmem>>, %arg19: memref<1x32xf32, #tpu.memory_space<vmem>>, %arg20: memref<32x64xf32, #tpu.memory_space<vmem>>, %arg21: memref<1x64xf32, #tpu.memory_space<vmem>>, %arg22: memref<64x32xf32, #tpu.memory_space<vmem>>, %arg23: memref<1x32xf32, #tpu.memory_space<vmem>>, %arg24: memref<1x32xf32, #tpu.memory_space<vmem>>, %arg25: memref<1x32xf32, #tpu.memory_space<vmem>>, %arg26: memref<1x8x32xf32, #tpu.memory_space<vmem>>) attributes {dimension_semantics = [#tpu.dimension_semantics<parallel>], iteration_bounds = array<i64: 2>, scalar_prefetch = 0 : i64, scratch_operands = 0 : i64, tpu.core_type = #tpu.core_type<tc>, window_params = [{transform_indices = @transform_0, window_bounds = array<i64: 1, 8, 32>}, {transform_indices = @transform_1, window_bounds = array<i64: 1, 8, 32>}, {transform_indices = @transform_2, window_bounds = array<i64: 1, 8, 32>}, {pipeline_mode = #tpu.pipeline_mode<synchronous>, transform_indices = @transform_3, window_bounds = array<i64: 8, 8>}, {pipeline_mode = #tpu.pipeline_mode<synchronous>, transform_indices = @transform_4, window_bounds = array<i64: 8, 8>}, {pipeline_mode = #tpu.pipeline_mode<synchronous>, transform_indices = @transform_5, window_bounds = array<i64: 32, 32>}, {pipeline_mode = #tpu.pipeline_mode<synchronous>, transform_indices = @transform_6, window_bounds = array<i64: 32, 32>}, {pipeline_mode = #tpu.pipeline_mode<synchronous>, transform_indices = @transform_7, window_bounds = array<i64: 32, 32>}, {pipeline_mode = #tpu.pipeline_mode<synchronous>, transform_indices = @transform_8, window_bounds = array<i64: 32, 32>}, {pipeline_mode = #tpu.pipeline_mode<synchronous>, transform_indices = @transform_9, window_bounds = array<i64: 1, 32>}, {pipeline_mode = #tpu.pipeline_mode<synchronous>, transform_indices = @transform_10, window_bounds = array<i64: 1, 32>}, {pipeline_mode = #tpu.pipeline_mode<synchronous>, transform_indices = @transform_11, window_bounds = array<i64: 1, 32>}, {pipeline_mode = #tpu.pipeline_mode<synchronous>, transform_indices = @transform_12, window_bounds = array<i64: 32, 32>}, {pipeline_mode = #tpu.pipeline_mode<synchronous>, transform_indices = @transform_13, window_bounds = array<i64: 32, 32>}, {pipeline_mode = #tpu.pipeline_mode<synchronous>, transform_indices = @transform_14, window_bounds = array<i64: 32, 32>}, {pipeline_mode = #tpu.pipeline_mode<synchronous>, transform_indices = @transform_15, window_bounds = array<i64: 32, 32>}, {pipeline_mode = #tpu.pipeline_mode<synchronous>, transform_indices = @transform_16, window_bounds = array<i64: 1, 32>}, {pipeline_mode = #tpu.pipeline_mode<synchronous>, transform_indices = @transform_17, window_bounds = array<i64: 1, 32>}, {pipeline_mode = #tpu.pipeline_mode<synchronous>, transform_indices = @transform_18, window_bounds = array<i64: 1, 32>}, {pipeline_mode = #tpu.pipeline_mode<synchronous>, transform_indices = @transform_19, window_bounds = array<i64: 32, 64>}, {pipeline_mode = #tpu.pipeline_mode<synchronous>, transform_indices = @transform_20, window_bounds = array<i64: 1, 64>}, {pipeline_mode = #tpu.pipeline_mode<synchronous>, transform_indices = @transform_21, window_bounds = array<i64: 64, 32>}, {pipeline_mode = #tpu.pipeline_mode<synchronous>, transform_indices = @transform_22, window_bounds = array<i64: 1, 32>}, {pipeline_mode = #tpu.pipeline_mode<synchronous>, transform_indices = @transform_23, window_bounds = array<i64: 1, 32>}, {pipeline_mode = #tpu.pipeline_mode<synchronous>, transform_indices = @transform_24, window_bounds = array<i64: 1, 32>}, {transform_indices = @transform_25, window_bounds = array<i64: 1, 8, 32>}]} {
    %c0 = arith.constant 0 : index
    %c0_0 = arith.constant 0 : index
    %c0_1 = arith.constant 0 : index
    %0 = vector.load %arg1[%c0, %c0_0, %c0_1] : memref<1x8x32xf32, #tpu.memory_space<vmem>>, vector<1x8x32xf32>
    %1 = vector.shape_cast %0 : vector<1x8x32xf32> to vector<8x32xf32>
    %c0_2 = arith.constant 0 : index
    %c0_3 = arith.constant 0 : index
    %c0_4 = arith.constant 0 : index
    %2 = vector.load %arg2[%c0_2, %c0_3, %c0_4] : memref<1x8x32xf32, #tpu.memory_space<vmem>>, vector<1x8x32xf32>
    %3 = vector.shape_cast %2 : vector<1x8x32xf32> to vector<8x32xf32>
    %c0_5 = arith.constant 0 : index
    %c0_6 = arith.constant 0 : index
    %c0_7 = arith.constant 0 : index
    %4 = vector.load %arg3[%c0_5, %c0_6, %c0_7] : memref<1x8x32xf32, #tpu.memory_space<vmem>>, vector<1x8x32xf32>
    %5 = vector.shape_cast %4 : vector<1x8x32xf32> to vector<8x32xf32>
    %c0_8 = arith.constant 0 : index
    %c0_9 = arith.constant 0 : index
    %6 = vector.load %arg4[%c0_8, %c0_9] : memref<8x8xf32, #tpu.memory_space<vmem>>, vector<8x8xf32>
    %c0_10 = arith.constant 0 : index
    %c0_11 = arith.constant 0 : index
    %7 = vector.load %arg6[%c0_10, %c0_11] : memref<32x32xf32, #tpu.memory_space<vmem>>, vector<32x32xf32>
    %cst = arith.constant dense<0.000000e+00> : vector<8x32xf32>
    %8 = tpu.matmul %1, %7, %cst {dimension_numbers = #tpu.dot_dimension_numbers<[1], [0], [0], [1], [0, 0, 1, 1], [], []>} : vector<8x32xf32>, vector<32x32xf32>, vector<8x32xf32> -> vector<8x32xf32>
    %c0_12 = arith.constant 0 : index
    %c0_13 = arith.constant 0 : index
    %9 = vector.load %arg7[%c0_12, %c0_13] : memref<32x32xf32, #tpu.memory_space<vmem>>, vector<32x32xf32>
    %cst_14 = arith.constant dense<0.000000e+00> : vector<8x32xf32>
    %10 = tpu.matmul %1, %9, %cst_14 {dimension_numbers = #tpu.dot_dimension_numbers<[1], [0], [0], [1], [0, 0, 1, 1], [], []>} : vector<8x32xf32>, vector<32x32xf32>, vector<8x32xf32> -> vector<8x32xf32>
    %c0_15 = arith.constant 0 : index
    %c0_16 = arith.constant 0 : index
    %11 = vector.load %arg8[%c0_15, %c0_16] : memref<32x32xf32, #tpu.memory_space<vmem>>, vector<32x32xf32>
    %cst_17 = arith.constant dense<0.000000e+00> : vector<8x32xf32>
    %12 = tpu.matmul %1, %11, %cst_17 {dimension_numbers = #tpu.dot_dimension_numbers<[1], [0], [0], [1], [0, 0, 1, 1], [], []>} : vector<8x32xf32>, vector<32x32xf32>, vector<8x32xf32> -> vector<8x32xf32>
    %c0_18 = arith.constant 0 : index
    %c0_19 = arith.constant 0 : index
    %13 = vector.load %arg9[%c0_18, %c0_19] : memref<32x32xf32, #tpu.memory_space<vmem>>, vector<32x32xf32>
    %cst_20 = arith.constant 0.000000e+00 : f32
    %14 = vector.broadcast %cst_20 : f32 to vector<8x32xf32>
    %15 = vector.extract_strided_slice %8 {offsets = [0, 0], sizes = [8, 8], strides = [1, 1]} : vector<8x32xf32> to vector<8x8xf32>
    %16 = vector.extract_strided_slice %10 {offsets = [0, 0], sizes = [8, 8], strides = [1, 1]} : vector<8x32xf32> to vector<8x8xf32>
    %17 = vector.extract_strided_slice %12 {offsets = [0, 0], sizes = [8, 8], strides = [1, 1]} : vector<8x32xf32> to vector<8x8xf32>
    %cst_21 = arith.constant dense<0.000000e+00> : vector<8x8xf32>
    %18 = tpu.matmul %15, %16, %cst_21 {dimension_numbers = #tpu.dot_dimension_numbers<[1], [1], [0], [0], [0, 0, 1, 0], [], []>} : vector<8x8xf32>, vector<8x8xf32>, vector<8x8xf32> -> vector<8x8xf32>
    %19 = arith.addf %18, %6 : vector<8x8xf32>
    %cst_22 = arith.constant 0.176776692 : f32
    %20 = vector.broadcast %cst_22 : f32 to vector<8x8xf32>
    %21 = arith.mulf %19, %20 : vector<8x8xf32>
    %cst_23 = arith.constant dense<0xFF800000> : vector<8xf32>
    %22 = vector.multi_reduction <maximumf>, %21, %cst_23 [1] : vector<8x8xf32> to vector<8xf32>
    %23 = vector.shape_cast %22 : vector<8xf32> to vector<8x1xf32>
    %24 = vector.broadcast %23 : vector<8x1xf32> to vector<8x8xf32>
    %25 = arith.subf %21, %24 : vector<8x8xf32>
    %26 = math.exp %25 : vector<8x8xf32>
    %cst_24 = arith.constant dense<0.000000e+00> : vector<8xf32>
    %27 = vector.multi_reduction <add>, %26, %cst_24 [1] : vector<8x8xf32> to vector<8xf32>
    %28 = vector.shape_cast %27 : vector<8xf32> to vector<8x1xf32>
    %29 = tpu.reciprocal %28 : vector<8x1xf32> -> vector<8x1xf32>
    %30 = vector.broadcast %29 : vector<8x1xf32> to vector<8x8xf32>
    %31 = arith.mulf %26, %30 : vector<8x8xf32>
    %cst_25 = arith.constant dense<0.000000e+00> : vector<8x8xf32>
    %32 = tpu.matmul %31, %17, %cst_25 {dimension_numbers = #tpu.dot_dimension_numbers<[1], [0], [0], [1], [0, 0, 1, 1], [], []>} : vector<8x8xf32>, vector<8x8xf32>, vector<8x8xf32> -> vector<8x8xf32>
    %33 = vector.extract_strided_slice %13 {offsets = [0, 0], sizes = [8, 32], strides = [1, 1]} : vector<32x32xf32> to vector<8x32xf32>
    %cst_26 = arith.constant dense<0.000000e+00> : vector<8x32xf32>
    %34 = tpu.matmul %32, %33, %cst_26 {dimension_numbers = #tpu.dot_dimension_numbers<[1], [0], [0], [1], [0, 0, 1, 1], [], []>} : vector<8x8xf32>, vector<8x32xf32>, vector<8x32xf32> -> vector<8x32xf32>
    %35 = arith.addf %14, %34 : vector<8x32xf32>
    %36 = vector.extract_strided_slice %8 {offsets = [0, 8], sizes = [8, 8], strides = [1, 1]} : vector<8x32xf32> to vector<8x8xf32>
    %37 = vector.extract_strided_slice %10 {offsets = [0, 8], sizes = [8, 8], strides = [1, 1]} : vector<8x32xf32> to vector<8x8xf32>
    %38 = vector.extract_strided_slice %12 {offsets = [0, 8], sizes = [8, 8], strides = [1, 1]} : vector<8x32xf32> to vector<8x8xf32>
    %cst_27 = arith.constant dense<0.000000e+00> : vector<8x8xf32>
    %39 = tpu.matmul %36, %37, %cst_27 {dimension_numbers = #tpu.dot_dimension_numbers<[1], [1], [0], [0], [0, 0, 1, 0], [], []>} : vector<8x8xf32>, vector<8x8xf32>, vector<8x8xf32> -> vector<8x8xf32>
    %40 = arith.addf %39, %6 : vector<8x8xf32>
    %cst_28 = arith.constant 0.176776692 : f32
    %41 = vector.broadcast %cst_28 : f32 to vector<8x8xf32>
    %42 = arith.mulf %40, %41 : vector<8x8xf32>
    %cst_29 = arith.constant dense<0xFF800000> : vector<8xf32>
    %43 = vector.multi_reduction <maximumf>, %42, %cst_29 [1] : vector<8x8xf32> to vector<8xf32>
    %44 = vector.shape_cast %43 : vector<8xf32> to vector<8x1xf32>
    %45 = vector.broadcast %44 : vector<8x1xf32> to vector<8x8xf32>
    %46 = arith.subf %42, %45 : vector<8x8xf32>
    %47 = math.exp %46 : vector<8x8xf32>
    %cst_30 = arith.constant dense<0.000000e+00> : vector<8xf32>
    %48 = vector.multi_reduction <add>, %47, %cst_30 [1] : vector<8x8xf32> to vector<8xf32>
    %49 = vector.shape_cast %48 : vector<8xf32> to vector<8x1xf32>
    %50 = tpu.reciprocal %49 : vector<8x1xf32> -> vector<8x1xf32>
    %51 = vector.broadcast %50 : vector<8x1xf32> to vector<8x8xf32>
    %52 = arith.mulf %47, %51 : vector<8x8xf32>
    %cst_31 = arith.constant dense<0.000000e+00> : vector<8x8xf32>
    %53 = tpu.matmul %52, %38, %cst_31 {dimension_numbers = #tpu.dot_dimension_numbers<[1], [0], [0], [1], [0, 0, 1, 1], [], []>} : vector<8x8xf32>, vector<8x8xf32>, vector<8x8xf32> -> vector<8x8xf32>
    %54 = vector.extract_strided_slice %13 {offsets = [8, 0], sizes = [8, 32], strides = [1, 1]} : vector<32x32xf32> to vector<8x32xf32>
    %cst_32 = arith.constant dense<0.000000e+00> : vector<8x32xf32>
    %55 = tpu.matmul %53, %54, %cst_32 {dimension_numbers = #tpu.dot_dimension_numbers<[1], [0], [0], [1], [0, 0, 1, 1], [], []>} : vector<8x8xf32>, vector<8x32xf32>, vector<8x32xf32> -> vector<8x32xf32>
    %56 = arith.addf %35, %55 : vector<8x32xf32>
    %57 = vector.extract_strided_slice %8 {offsets = [0, 16], sizes = [8, 8], strides = [1, 1]} : vector<8x32xf32> to vector<8x8xf32>
    %58 = vector.extract_strided_slice %10 {offsets = [0, 16], sizes = [8, 8], strides = [1, 1]} : vector<8x32xf32> to vector<8x8xf32>
    %59 = vector.extract_strided_slice %12 {offsets = [0, 16], sizes = [8, 8], strides = [1, 1]} : vector<8x32xf32> to vector<8x8xf32>
    %cst_33 = arith.constant dense<0.000000e+00> : vector<8x8xf32>
    %60 = tpu.matmul %57, %58, %cst_33 {dimension_numbers = #tpu.dot_dimension_numbers<[1], [1], [0], [0], [0, 0, 1, 0], [], []>} : vector<8x8xf32>, vector<8x8xf32>, vector<8x8xf32> -> vector<8x8xf32>
    %61 = arith.addf %60, %6 : vector<8x8xf32>
    %cst_34 = arith.constant 0.176776692 : f32
    %62 = vector.broadcast %cst_34 : f32 to vector<8x8xf32>
    %63 = arith.mulf %61, %62 : vector<8x8xf32>
    %cst_35 = arith.constant dense<0xFF800000> : vector<8xf32>
    %64 = vector.multi_reduction <maximumf>, %63, %cst_35 [1] : vector<8x8xf32> to vector<8xf32>
    %65 = vector.shape_cast %64 : vector<8xf32> to vector<8x1xf32>
    %66 = vector.broadcast %65 : vector<8x1xf32> to vector<8x8xf32>
    %67 = arith.subf %63, %66 : vector<8x8xf32>
    %68 = math.exp %67 : vector<8x8xf32>
    %cst_36 = arith.constant dense<0.000000e+00> : vector<8xf32>
    %69 = vector.multi_reduction <add>, %68, %cst_36 [1] : vector<8x8xf32> to vector<8xf32>
    %70 = vector.shape_cast %69 : vector<8xf32> to vector<8x1xf32>
    %71 = tpu.reciprocal %70 : vector<8x1xf32> -> vector<8x1xf32>
    %72 = vector.broadcast %71 : vector<8x1xf32> to vector<8x8xf32>
    %73 = arith.mulf %68, %72 : vector<8x8xf32>
    %cst_37 = arith.constant dense<0.000000e+00> : vector<8x8xf32>
    %74 = tpu.matmul %73, %59, %cst_37 {dimension_numbers = #tpu.dot_dimension_numbers<[1], [0], [0], [1], [0, 0, 1, 1], [], []>} : vector<8x8xf32>, vector<8x8xf32>, vector<8x8xf32> -> vector<8x8xf32>
    %75 = vector.extract_strided_slice %13 {offsets = [16, 0], sizes = [8, 32], strides = [1, 1]} : vector<32x32xf32> to vector<8x32xf32>
    %cst_38 = arith.constant dense<0.000000e+00> : vector<8x32xf32>
    %76 = tpu.matmul %74, %75, %cst_38 {dimension_numbers = #tpu.dot_dimension_numbers<[1], [0], [0], [1], [0, 0, 1, 1], [], []>} : vector<8x8xf32>, vector<8x32xf32>, vector<8x32xf32> -> vector<8x32xf32>
    %77 = arith.addf %56, %76 : vector<8x32xf32>
    %78 = vector.extract_strided_slice %8 {offsets = [0, 24], sizes = [8, 8], strides = [1, 1]} : vector<8x32xf32> to vector<8x8xf32>
    %79 = vector.extract_strided_slice %10 {offsets = [0, 24], sizes = [8, 8], strides = [1, 1]} : vector<8x32xf32> to vector<8x8xf32>
    %80 = vector.extract_strided_slice %12 {offsets = [0, 24], sizes = [8, 8], strides = [1, 1]} : vector<8x32xf32> to vector<8x8xf32>
    %cst_39 = arith.constant dense<0.000000e+00> : vector<8x8xf32>
    %81 = tpu.matmul %78, %79, %cst_39 {dimension_numbers = #tpu.dot_dimension_numbers<[1], [1], [0], [0], [0, 0, 1, 0], [], []>} : vector<8x8xf32>, vector<8x8xf32>, vector<8x8xf32> -> vector<8x8xf32>
    %82 = arith.addf %81, %6 : vector<8x8xf32>
    %cst_40 = arith.constant 0.176776692 : f32
    %83 = vector.broadcast %cst_40 : f32 to vector<8x8xf32>
    %84 = arith.mulf %82, %83 : vector<8x8xf32>
    %cst_41 = arith.constant dense<0xFF800000> : vector<8xf32>
    %85 = vector.multi_reduction <maximumf>, %84, %cst_41 [1] : vector<8x8xf32> to vector<8xf32>
    %86 = vector.shape_cast %85 : vector<8xf32> to vector<8x1xf32>
    %87 = vector.broadcast %86 : vector<8x1xf32> to vector<8x8xf32>
    %88 = arith.subf %84, %87 : vector<8x8xf32>
    %89 = math.exp %88 : vector<8x8xf32>
    %cst_42 = arith.constant dense<0.000000e+00> : vector<8xf32>
    %90 = vector.multi_reduction <add>, %89, %cst_42 [1] : vector<8x8xf32> to vector<8xf32>
    %91 = vector.shape_cast %90 : vector<8xf32> to vector<8x1xf32>
    %92 = tpu.reciprocal %91 : vector<8x1xf32> -> vector<8x1xf32>
    %93 = vector.broadcast %92 : vector<8x1xf32> to vector<8x8xf32>
    %94 = arith.mulf %89, %93 : vector<8x8xf32>
    %cst_43 = arith.constant dense<0.000000e+00> : vector<8x8xf32>
    %95 = tpu.matmul %94, %80, %cst_43 {dimension_numbers = #tpu.dot_dimension_numbers<[1], [0], [0], [1], [0, 0, 1, 1], [], []>} : vector<8x8xf32>, vector<8x8xf32>, vector<8x8xf32> -> vector<8x8xf32>
    %96 = vector.extract_strided_slice %13 {offsets = [24, 0], sizes = [8, 32], strides = [1, 1]} : vector<32x32xf32> to vector<8x32xf32>
    %cst_44 = arith.constant dense<0.000000e+00> : vector<8x32xf32>
    %97 = tpu.matmul %95, %96, %cst_44 {dimension_numbers = #tpu.dot_dimension_numbers<[1], [0], [0], [1], [0, 0, 1, 1], [], []>} : vector<8x8xf32>, vector<8x32xf32>, vector<8x32xf32> -> vector<8x32xf32>
    %98 = arith.addf %77, %97 : vector<8x32xf32>
    %c0_45 = arith.constant 0 : index
    %c0_46 = arith.constant 0 : index
    %99 = vector.load %arg10[%c0_45, %c0_46] : memref<1x32xf32, #tpu.memory_space<vmem>>, vector<1x32xf32>
    %100 = vector.broadcast %99 : vector<1x32xf32> to vector<8x32xf32>
    %101 = arith.addf %98, %100 : vector<8x32xf32>
    %102 = arith.addf %101, %1 : vector<8x32xf32>
    %c0_47 = arith.constant 0 : index
    %c0_48 = arith.constant 0 : index
    %103 = vector.load %arg11[%c0_47, %c0_48] : memref<1x32xf32, #tpu.memory_space<vmem>>, vector<1x32xf32>
    %c0_49 = arith.constant 0 : index
    %c0_50 = arith.constant 0 : index
    %104 = vector.load %arg12[%c0_49, %c0_50] : memref<1x32xf32, #tpu.memory_space<vmem>>, vector<1x32xf32>
    %cst_51 = arith.constant dense<0.000000e+00> : vector<8xf32>
    %105 = vector.multi_reduction <add>, %102, %cst_51 [1] : vector<8x32xf32> to vector<8xf32>
    %106 = vector.shape_cast %105 : vector<8xf32> to vector<8x1xf32>
    %cst_52 = arith.constant 3.200000e+01 : f32
    %107 = vector.broadcast %cst_52 : f32 to vector<8x1xf32>
    %108 = arith.divf %106, %107 : vector<8x1xf32>
    %109 = vector.broadcast %108 : vector<8x1xf32> to vector<8x32xf32>
    %110 = arith.subf %102, %109 : vector<8x32xf32>
    %111 = arith.mulf %110, %110 : vector<8x32xf32>
    %cst_53 = arith.constant dense<0.000000e+00> : vector<8xf32>
    %112 = vector.multi_reduction <add>, %111, %cst_53 [1] : vector<8x32xf32> to vector<8xf32>
    %113 = vector.shape_cast %112 : vector<8xf32> to vector<8x1xf32>
    %cst_54 = arith.constant 3.200000e+01 : f32
    %114 = vector.broadcast %cst_54 : f32 to vector<8x1xf32>
    %115 = arith.divf %113, %114 : vector<8x1xf32>
    %116 = vector.broadcast %108 : vector<8x1xf32> to vector<8x32xf32>
    %117 = arith.subf %102, %116 : vector<8x32xf32>
    %cst_55 = arith.constant 9.99999974E-6 : f32
    %118 = vector.broadcast %cst_55 : f32 to vector<8x1xf32>
    %119 = arith.addf %115, %118 : vector<8x1xf32>
    %120 = math.rsqrt %119 : vector<8x1xf32>
    %121 = vector.broadcast %120 : vector<8x1xf32> to vector<8x32xf32>
    %122 = arith.mulf %117, %121 : vector<8x32xf32>
    %123 = vector.broadcast %103 : vector<1x32xf32> to vector<8x32xf32>
    %124 = arith.mulf %122, %123 : vector<8x32xf32>
    %125 = vector.broadcast %104 : vector<1x32xf32> to vector<8x32xf32>
    %126 = arith.addf %124, %125 : vector<8x32xf32>
    %c0_56 = arith.constant 0 : index
    %c0_57 = arith.constant 0 : index
    %127 = vector.load %arg5[%c0_56, %c0_57] : memref<8x8xf32, #tpu.memory_space<vmem>>, vector<8x8xf32>
    %c0_58 = arith.constant 0 : index
    %c0_59 = arith.constant 0 : index
    %128 = vector.load %arg13[%c0_58, %c0_59] : memref<32x32xf32, #tpu.memory_space<vmem>>, vector<32x32xf32>
    %cst_60 = arith.constant dense<0.000000e+00> : vector<8x32xf32>
    %129 = tpu.matmul %126, %128, %cst_60 {dimension_numbers = #tpu.dot_dimension_numbers<[1], [0], [0], [1], [0, 0, 1, 1], [], []>} : vector<8x32xf32>, vector<32x32xf32>, vector<8x32xf32> -> vector<8x32xf32>
    %c0_61 = arith.constant 0 : index
    %c0_62 = arith.constant 0 : index
    %130 = vector.load %arg14[%c0_61, %c0_62] : memref<32x32xf32, #tpu.memory_space<vmem>>, vector<32x32xf32>
    %cst_63 = arith.constant dense<0.000000e+00> : vector<8x32xf32>
    %131 = tpu.matmul %5, %130, %cst_63 {dimension_numbers = #tpu.dot_dimension_numbers<[1], [0], [0], [1], [0, 0, 1, 1], [], []>} : vector<8x32xf32>, vector<32x32xf32>, vector<8x32xf32> -> vector<8x32xf32>
    %c0_64 = arith.constant 0 : index
    %c0_65 = arith.constant 0 : index
    %132 = vector.load %arg15[%c0_64, %c0_65] : memref<32x32xf32, #tpu.memory_space<vmem>>, vector<32x32xf32>
    %cst_66 = arith.constant dense<0.000000e+00> : vector<8x32xf32>
    %133 = tpu.matmul %3, %132, %cst_66 {dimension_numbers = #tpu.dot_dimension_numbers<[1], [0], [0], [1], [0, 0, 1, 1], [], []>} : vector<8x32xf32>, vector<32x32xf32>, vector<8x32xf32> -> vector<8x32xf32>
    %c0_67 = arith.constant 0 : index
    %c0_68 = arith.constant 0 : index
    %134 = vector.load %arg16[%c0_67, %c0_68] : memref<32x32xf32, #tpu.memory_space<vmem>>, vector<32x32xf32>
    %cst_69 = arith.constant 0.000000e+00 : f32
    %135 = vector.broadcast %cst_69 : f32 to vector<8x32xf32>
    %136 = vector.extract_strided_slice %129 {offsets = [0, 0], sizes = [8, 8], strides = [1, 1]} : vector<8x32xf32> to vector<8x8xf32>
    %137 = vector.extract_strided_slice %131 {offsets = [0, 0], sizes = [8, 8], strides = [1, 1]} : vector<8x32xf32> to vector<8x8xf32>
    %138 = vector.extract_strided_slice %133 {offsets = [0, 0], sizes = [8, 8], strides = [1, 1]} : vector<8x32xf32> to vector<8x8xf32>
    %cst_70 = arith.constant dense<0.000000e+00> : vector<8x8xf32>
    %139 = tpu.matmul %136, %137, %cst_70 {dimension_numbers = #tpu.dot_dimension_numbers<[1], [1], [0], [0], [0, 0, 1, 0], [], []>} : vector<8x8xf32>, vector<8x8xf32>, vector<8x8xf32> -> vector<8x8xf32>
    %140 = arith.addf %139, %127 : vector<8x8xf32>
    %cst_71 = arith.constant 0.176776692 : f32
    %141 = vector.broadcast %cst_71 : f32 to vector<8x8xf32>
    %142 = arith.mulf %140, %141 : vector<8x8xf32>
    %cst_72 = arith.constant dense<0xFF800000> : vector<8xf32>
    %143 = vector.multi_reduction <maximumf>, %142, %cst_72 [1] : vector<8x8xf32> to vector<8xf32>
    %144 = vector.shape_cast %143 : vector<8xf32> to vector<8x1xf32>
    %145 = vector.broadcast %144 : vector<8x1xf32> to vector<8x8xf32>
    %146 = arith.subf %142, %145 : vector<8x8xf32>
    %147 = math.exp %146 : vector<8x8xf32>
    %cst_73 = arith.constant dense<0.000000e+00> : vector<8xf32>
    %148 = vector.multi_reduction <add>, %147, %cst_73 [1] : vector<8x8xf32> to vector<8xf32>
    %149 = vector.shape_cast %148 : vector<8xf32> to vector<8x1xf32>
    %150 = tpu.reciprocal %149 : vector<8x1xf32> -> vector<8x1xf32>
    %151 = vector.broadcast %150 : vector<8x1xf32> to vector<8x8xf32>
    %152 = arith.mulf %147, %151 : vector<8x8xf32>
    %cst_74 = arith.constant dense<0.000000e+00> : vector<8x8xf32>
    %153 = tpu.matmul %152, %138, %cst_74 {dimension_numbers = #tpu.dot_dimension_numbers<[1], [0], [0], [1], [0, 0, 1, 1], [], []>} : vector<8x8xf32>, vector<8x8xf32>, vector<8x8xf32> -> vector<8x8xf32>
    %154 = vector.extract_strided_slice %134 {offsets = [0, 0], sizes = [8, 32], strides = [1, 1]} : vector<32x32xf32> to vector<8x32xf32>
    %cst_75 = arith.constant dense<0.000000e+00> : vector<8x32xf32>
    %155 = tpu.matmul %153, %154, %cst_75 {dimension_numbers = #tpu.dot_dimension_numbers<[1], [0], [0], [1], [0, 0, 1, 1], [], []>} : vector<8x8xf32>, vector<8x32xf32>, vector<8x32xf32> -> vector<8x32xf32>
    %156 = arith.addf %135, %155 : vector<8x32xf32>
    %157 = vector.extract_strided_slice %129 {offsets = [0, 8], sizes = [8, 8], strides = [1, 1]} : vector<8x32xf32> to vector<8x8xf32>
    %158 = vector.extract_strided_slice %131 {offsets = [0, 8], sizes = [8, 8], strides = [1, 1]} : vector<8x32xf32> to vector<8x8xf32>
    %159 = vector.extract_strided_slice %133 {offsets = [0, 8], sizes = [8, 8], strides = [1, 1]} : vector<8x32xf32> to vector<8x8xf32>
    %cst_76 = arith.constant dense<0.000000e+00> : vector<8x8xf32>
    %160 = tpu.matmul %157, %158, %cst_76 {dimension_numbers = #tpu.dot_dimension_numbers<[1], [1], [0], [0], [0, 0, 1, 0], [], []>} : vector<8x8xf32>, vector<8x8xf32>, vector<8x8xf32> -> vector<8x8xf32>
    %161 = arith.addf %160, %127 : vector<8x8xf32>
    %cst_77 = arith.constant 0.176776692 : f32
    %162 = vector.broadcast %cst_77 : f32 to vector<8x8xf32>
    %163 = arith.mulf %161, %162 : vector<8x8xf32>
    %cst_78 = arith.constant dense<0xFF800000> : vector<8xf32>
    %164 = vector.multi_reduction <maximumf>, %163, %cst_78 [1] : vector<8x8xf32> to vector<8xf32>
    %165 = vector.shape_cast %164 : vector<8xf32> to vector<8x1xf32>
    %166 = vector.broadcast %165 : vector<8x1xf32> to vector<8x8xf32>
    %167 = arith.subf %163, %166 : vector<8x8xf32>
    %168 = math.exp %167 : vector<8x8xf32>
    %cst_79 = arith.constant dense<0.000000e+00> : vector<8xf32>
    %169 = vector.multi_reduction <add>, %168, %cst_79 [1] : vector<8x8xf32> to vector<8xf32>
    %170 = vector.shape_cast %169 : vector<8xf32> to vector<8x1xf32>
    %171 = tpu.reciprocal %170 : vector<8x1xf32> -> vector<8x1xf32>
    %172 = vector.broadcast %171 : vector<8x1xf32> to vector<8x8xf32>
    %173 = arith.mulf %168, %172 : vector<8x8xf32>
    %cst_80 = arith.constant dense<0.000000e+00> : vector<8x8xf32>
    %174 = tpu.matmul %173, %159, %cst_80 {dimension_numbers = #tpu.dot_dimension_numbers<[1], [0], [0], [1], [0, 0, 1, 1], [], []>} : vector<8x8xf32>, vector<8x8xf32>, vector<8x8xf32> -> vector<8x8xf32>
    %175 = vector.extract_strided_slice %134 {offsets = [8, 0], sizes = [8, 32], strides = [1, 1]} : vector<32x32xf32> to vector<8x32xf32>
    %cst_81 = arith.constant dense<0.000000e+00> : vector<8x32xf32>
    %176 = tpu.matmul %174, %175, %cst_81 {dimension_numbers = #tpu.dot_dimension_numbers<[1], [0], [0], [1], [0, 0, 1, 1], [], []>} : vector<8x8xf32>, vector<8x32xf32>, vector<8x32xf32> -> vector<8x32xf32>
    %177 = arith.addf %156, %176 : vector<8x32xf32>
    %178 = vector.extract_strided_slice %129 {offsets = [0, 16], sizes = [8, 8], strides = [1, 1]} : vector<8x32xf32> to vector<8x8xf32>
    %179 = vector.extract_strided_slice %131 {offsets = [0, 16], sizes = [8, 8], strides = [1, 1]} : vector<8x32xf32> to vector<8x8xf32>
    %180 = vector.extract_strided_slice %133 {offsets = [0, 16], sizes = [8, 8], strides = [1, 1]} : vector<8x32xf32> to vector<8x8xf32>
    %cst_82 = arith.constant dense<0.000000e+00> : vector<8x8xf32>
    %181 = tpu.matmul %178, %179, %cst_82 {dimension_numbers = #tpu.dot_dimension_numbers<[1], [1], [0], [0], [0, 0, 1, 0], [], []>} : vector<8x8xf32>, vector<8x8xf32>, vector<8x8xf32> -> vector<8x8xf32>
    %182 = arith.addf %181, %127 : vector<8x8xf32>
    %cst_83 = arith.constant 0.176776692 : f32
    %183 = vector.broadcast %cst_83 : f32 to vector<8x8xf32>
    %184 = arith.mulf %182, %183 : vector<8x8xf32>
    %cst_84 = arith.constant dense<0xFF800000> : vector<8xf32>
    %185 = vector.multi_reduction <maximumf>, %184, %cst_84 [1] : vector<8x8xf32> to vector<8xf32>
    %186 = vector.shape_cast %185 : vector<8xf32> to vector<8x1xf32>
    %187 = vector.broadcast %186 : vector<8x1xf32> to vector<8x8xf32>
    %188 = arith.subf %184, %187 : vector<8x8xf32>
    %189 = math.exp %188 : vector<8x8xf32>
    %cst_85 = arith.constant dense<0.000000e+00> : vector<8xf32>
    %190 = vector.multi_reduction <add>, %189, %cst_85 [1] : vector<8x8xf32> to vector<8xf32>
    %191 = vector.shape_cast %190 : vector<8xf32> to vector<8x1xf32>
    %192 = tpu.reciprocal %191 : vector<8x1xf32> -> vector<8x1xf32>
    %193 = vector.broadcast %192 : vector<8x1xf32> to vector<8x8xf32>
    %194 = arith.mulf %189, %193 : vector<8x8xf32>
    %cst_86 = arith.constant dense<0.000000e+00> : vector<8x8xf32>
    %195 = tpu.matmul %194, %180, %cst_86 {dimension_numbers = #tpu.dot_dimension_numbers<[1], [0], [0], [1], [0, 0, 1, 1], [], []>} : vector<8x8xf32>, vector<8x8xf32>, vector<8x8xf32> -> vector<8x8xf32>
    %196 = vector.extract_strided_slice %134 {offsets = [16, 0], sizes = [8, 32], strides = [1, 1]} : vector<32x32xf32> to vector<8x32xf32>
    %cst_87 = arith.constant dense<0.000000e+00> : vector<8x32xf32>
    %197 = tpu.matmul %195, %196, %cst_87 {dimension_numbers = #tpu.dot_dimension_numbers<[1], [0], [0], [1], [0, 0, 1, 1], [], []>} : vector<8x8xf32>, vector<8x32xf32>, vector<8x32xf32> -> vector<8x32xf32>
    %198 = arith.addf %177, %197 : vector<8x32xf32>
    %199 = vector.extract_strided_slice %129 {offsets = [0, 24], sizes = [8, 8], strides = [1, 1]} : vector<8x32xf32> to vector<8x8xf32>
    %200 = vector.extract_strided_slice %131 {offsets = [0, 24], sizes = [8, 8], strides = [1, 1]} : vector<8x32xf32> to vector<8x8xf32>
    %201 = vector.extract_strided_slice %133 {offsets = [0, 24], sizes = [8, 8], strides = [1, 1]} : vector<8x32xf32> to vector<8x8xf32>
    %cst_88 = arith.constant dense<0.000000e+00> : vector<8x8xf32>
    %202 = tpu.matmul %199, %200, %cst_88 {dimension_numbers = #tpu.dot_dimension_numbers<[1], [1], [0], [0], [0, 0, 1, 0], [], []>} : vector<8x8xf32>, vector<8x8xf32>, vector<8x8xf32> -> vector<8x8xf32>
    %203 = arith.addf %202, %127 : vector<8x8xf32>
    %cst_89 = arith.constant 0.176776692 : f32
    %204 = vector.broadcast %cst_89 : f32 to vector<8x8xf32>
    %205 = arith.mulf %203, %204 : vector<8x8xf32>
    %cst_90 = arith.constant dense<0xFF800000> : vector<8xf32>
    %206 = vector.multi_reduction <maximumf>, %205, %cst_90 [1] : vector<8x8xf32> to vector<8xf32>
    %207 = vector.shape_cast %206 : vector<8xf32> to vector<8x1xf32>
    %208 = vector.broadcast %207 : vector<8x1xf32> to vector<8x8xf32>
    %209 = arith.subf %205, %208 : vector<8x8xf32>
    %210 = math.exp %209 : vector<8x8xf32>
    %cst_91 = arith.constant dense<0.000000e+00> : vector<8xf32>
    %211 = vector.multi_reduction <add>, %210, %cst_91 [1] : vector<8x8xf32> to vector<8xf32>
    %212 = vector.shape_cast %211 : vector<8xf32> to vector<8x1xf32>
    %213 = tpu.reciprocal %212 : vector<8x1xf32> -> vector<8x1xf32>
    %214 = vector.broadcast %213 : vector<8x1xf32> to vector<8x8xf32>
    %215 = arith.mulf %210, %214 : vector<8x8xf32>
    %cst_92 = arith.constant dense<0.000000e+00> : vector<8x8xf32>
    %216 = tpu.matmul %215, %201, %cst_92 {dimension_numbers = #tpu.dot_dimension_numbers<[1], [0], [0], [1], [0, 0, 1, 1], [], []>} : vector<8x8xf32>, vector<8x8xf32>, vector<8x8xf32> -> vector<8x8xf32>
    %217 = vector.extract_strided_slice %134 {offsets = [24, 0], sizes = [8, 32], strides = [1, 1]} : vector<32x32xf32> to vector<8x32xf32>
    %cst_93 = arith.constant dense<0.000000e+00> : vector<8x32xf32>
    %218 = tpu.matmul %216, %217, %cst_93 {dimension_numbers = #tpu.dot_dimension_numbers<[1], [0], [0], [1], [0, 0, 1, 1], [], []>} : vector<8x8xf32>, vector<8x32xf32>, vector<8x32xf32> -> vector<8x32xf32>
    %219 = arith.addf %198, %218 : vector<8x32xf32>
    %c0_94 = arith.constant 0 : index
    %c0_95 = arith.constant 0 : index
    %220 = vector.load %arg17[%c0_94, %c0_95] : memref<1x32xf32, #tpu.memory_space<vmem>>, vector<1x32xf32>
    %221 = vector.broadcast %220 : vector<1x32xf32> to vector<8x32xf32>
    %222 = arith.addf %219, %221 : vector<8x32xf32>
    %223 = arith.addf %222, %126 : vector<8x32xf32>
    %c0_96 = arith.constant 0 : index
    %c0_97 = arith.constant 0 : index
    %224 = vector.load %arg18[%c0_96, %c0_97] : memref<1x32xf32, #tpu.memory_space<vmem>>, vector<1x32xf32>
    %c0_98 = arith.constant 0 : index
    %c0_99 = arith.constant 0 : index
    %225 = vector.load %arg19[%c0_98, %c0_99] : memref<1x32xf32, #tpu.memory_space<vmem>>, vector<1x32xf32>
    %cst_100 = arith.constant dense<0.000000e+00> : vector<8xf32>
    %226 = vector.multi_reduction <add>, %223, %cst_100 [1] : vector<8x32xf32> to vector<8xf32>
    %227 = vector.shape_cast %226 : vector<8xf32> to vector<8x1xf32>
    %cst_101 = arith.constant 3.200000e+01 : f32
    %228 = vector.broadcast %cst_101 : f32 to vector<8x1xf32>
    %229 = arith.divf %227, %228 : vector<8x1xf32>
    %230 = vector.broadcast %229 : vector<8x1xf32> to vector<8x32xf32>
    %231 = arith.subf %223, %230 : vector<8x32xf32>
    %232 = arith.mulf %231, %231 : vector<8x32xf32>
    %cst_102 = arith.constant dense<0.000000e+00> : vector<8xf32>
    %233 = vector.multi_reduction <add>, %232, %cst_102 [1] : vector<8x32xf32> to vector<8xf32>
    %234 = vector.shape_cast %233 : vector<8xf32> to vector<8x1xf32>
    %cst_103 = arith.constant 3.200000e+01 : f32
    %235 = vector.broadcast %cst_103 : f32 to vector<8x1xf32>
    %236 = arith.divf %234, %235 : vector<8x1xf32>
    %237 = vector.broadcast %229 : vector<8x1xf32> to vector<8x32xf32>
    %238 = arith.subf %223, %237 : vector<8x32xf32>
    %cst_104 = arith.constant 9.99999974E-6 : f32
    %239 = vector.broadcast %cst_104 : f32 to vector<8x1xf32>
    %240 = arith.addf %236, %239 : vector<8x1xf32>
    %241 = math.rsqrt %240 : vector<8x1xf32>
    %242 = vector.broadcast %241 : vector<8x1xf32> to vector<8x32xf32>
    %243 = arith.mulf %238, %242 : vector<8x32xf32>
    %244 = vector.broadcast %224 : vector<1x32xf32> to vector<8x32xf32>
    %245 = arith.mulf %243, %244 : vector<8x32xf32>
    %246 = vector.broadcast %225 : vector<1x32xf32> to vector<8x32xf32>
    %247 = arith.addf %245, %246 : vector<8x32xf32>
    %c0_105 = arith.constant 0 : index
    %c0_106 = arith.constant 0 : index
    %248 = vector.load %arg20[%c0_105, %c0_106] : memref<32x64xf32, #tpu.memory_space<vmem>>, vector<32x64xf32>
    %cst_107 = arith.constant dense<0.000000e+00> : vector<8x64xf32>
    %249 = tpu.matmul %247, %248, %cst_107 {dimension_numbers = #tpu.dot_dimension_numbers<[1], [0], [0], [1], [0, 0, 1, 1], [], []>} : vector<8x32xf32>, vector<32x64xf32>, vector<8x64xf32> -> vector<8x64xf32>
    %c0_108 = arith.constant 0 : index
    %c0_109 = arith.constant 0 : index
    %250 = vector.load %arg21[%c0_108, %c0_109] : memref<1x64xf32, #tpu.memory_space<vmem>>, vector<1x64xf32>
    %251 = vector.broadcast %250 : vector<1x64xf32> to vector<8x64xf32>
    %252 = arith.addf %249, %251 : vector<8x64xf32>
    %cst_110 = arith.constant 0.000000e+00 : f32
    %253 = vector.broadcast %cst_110 : f32 to vector<8x64xf32>
    %254 = arith.maximumf %252, %253 : vector<8x64xf32>
    %c0_111 = arith.constant 0 : index
    %c0_112 = arith.constant 0 : index
    %255 = vector.load %arg22[%c0_111, %c0_112] : memref<64x32xf32, #tpu.memory_space<vmem>>, vector<64x32xf32>
    %cst_113 = arith.constant dense<0.000000e+00> : vector<8x32xf32>
    %256 = tpu.matmul %254, %255, %cst_113 {dimension_numbers = #tpu.dot_dimension_numbers<[1], [0], [0], [1], [0, 0, 1, 1], [], []>} : vector<8x64xf32>, vector<64x32xf32>, vector<8x32xf32> -> vector<8x32xf32>
    %c0_114 = arith.constant 0 : index
    %c0_115 = arith.constant 0 : index
    %257 = vector.load %arg23[%c0_114, %c0_115] : memref<1x32xf32, #tpu.memory_space<vmem>>, vector<1x32xf32>
    %258 = vector.broadcast %257 : vector<1x32xf32> to vector<8x32xf32>
    %259 = arith.addf %256, %258 : vector<8x32xf32>
    %260 = arith.addf %259, %247 : vector<8x32xf32>
    %c0_116 = arith.constant 0 : index
    %c0_117 = arith.constant 0 : index
    %261 = vector.load %arg24[%c0_116, %c0_117] : memref<1x32xf32, #tpu.memory_space<vmem>>, vector<1x32xf32>
    %c0_118 = arith.constant 0 : index
    %c0_119 = arith.constant 0 : index
    %262 = vector.load %arg25[%c0_118, %c0_119] : memref<1x32xf32, #tpu.memory_space<vmem>>, vector<1x32xf32>
    %cst_120 = arith.constant dense<0.000000e+00> : vector<8xf32>
    %263 = vector.multi_reduction <add>, %260, %cst_120 [1] : vector<8x32xf32> to vector<8xf32>
    %264 = vector.shape_cast %263 : vector<8xf32> to vector<8x1xf32>
    %cst_121 = arith.constant 3.200000e+01 : f32
    %265 = vector.broadcast %cst_121 : f32 to vector<8x1xf32>
    %266 = arith.divf %264, %265 : vector<8x1xf32>
    %267 = vector.broadcast %266 : vector<8x1xf32> to vector<8x32xf32>
    %268 = arith.subf %260, %267 : vector<8x32xf32>
    %269 = arith.mulf %268, %268 : vector<8x32xf32>
    %cst_122 = arith.constant dense<0.000000e+00> : vector<8xf32>
    %270 = vector.multi_reduction <add>, %269, %cst_122 [1] : vector<8x32xf32> to vector<8xf32>
    %271 = vector.shape_cast %270 : vector<8xf32> to vector<8x1xf32>
    %cst_123 = arith.constant 3.200000e+01 : f32
    %272 = vector.broadcast %cst_123 : f32 to vector<8x1xf32>
    %273 = arith.divf %271, %272 : vector<8x1xf32>
    %274 = vector.broadcast %266 : vector<8x1xf32> to vector<8x32xf32>
    %275 = arith.subf %260, %274 : vector<8x32xf32>
    %cst_124 = arith.constant 9.99999974E-6 : f32
    %276 = vector.broadcast %cst_124 : f32 to vector<8x1xf32>
    %277 = arith.addf %273, %276 : vector<8x1xf32>
    %278 = math.rsqrt %277 : vector<8x1xf32>
    %279 = vector.broadcast %278 : vector<8x1xf32> to vector<8x32xf32>
    %280 = arith.mulf %275, %279 : vector<8x32xf32>
    %281 = vector.broadcast %261 : vector<1x32xf32> to vector<8x32xf32>
    %282 = arith.mulf %280, %281 : vector<8x32xf32>
    %283 = vector.broadcast %262 : vector<1x32xf32> to vector<8x32xf32>
    %284 = arith.addf %282, %283 : vector<8x32xf32>
    %c0_125 = arith.constant 0 : index
    %c0_126 = arith.constant 0 : index
    %c0_127 = arith.constant 0 : index
    %285 = vector.load %arg26[%c0_125, %c0_126, %c0_127] : memref<1x8x32xf32, #tpu.memory_space<vmem>>, vector<1x8x32xf32>
    %286 = vector.shape_cast %285 : vector<1x8x32xf32> to vector<8x32xf32>
    %287 = vector.shape_cast %284 : vector<8x32xf32> to vector<1x8x32xf32>
    tpu.vector_store %arg26[%c0_125, %c0_126, %c0_127], %287 {strides = array<i32>} : memref<1x8x32xf32, #tpu.memory_space<vmem>>, vector<1x8x32xf32>,
    return
  }
  func.func @transform_0(%arg0: i32) -> (i32, i32, i32) {
    %c0_i32 = arith.constant 0 : i32
    %c0_i32_0 = arith.constant 0 : i32
    %c0_i32_1 = arith.constant 0 : i32
    return %arg0, %c0_i32, %c0_i32_0 : i32, i32, i32
  }
  func.func @transform_1(%arg0: i32) -> (i32, i32, i32) {
    %c0_i32 = arith.constant 0 : i32
    %c0_i32_0 = arith.constant 0 : i32
    %c0_i32_1 = arith.constant 0 : i32
    return %arg0, %c0_i32, %c0_i32_0 : i32, i32, i32
  }
  func.func @transform_2(%arg0: i32) -> (i32, i32, i32) {
    %c0_i32 = arith.constant 0 : i32
    %c0_i32_0 = arith.constant 0 : i32
    %c0_i32_1 = arith.constant 0 : i32
    return %arg0, %c0_i32, %c0_i32_0 : i32, i32, i32
  }
  func.func @transform_3(%arg0: i32) -> (i32, i32) {
    %c0_i32 = arith.constant 0 : i32
    %c0_i32_0 = arith.constant 0 : i32
    %c0_i32_1 = arith.constant 0 : i32
    return %c0_i32, %c0_i32_0 : i32, i32
  }
  func.func @transform_4(%arg0: i32) -> (i32, i32) {
    %c0_i32 = arith.constant 0 : i32
    %c0_i32_0 = arith.constant 0 : i32
    %c0_i32_1 = arith.constant 0 : i32
    return %c0_i32, %c0_i32_0 : i32, i32
  }
  func.func @transform_5(%arg0: i32) -> (i32, i32) {
    %c0_i32 = arith.constant 0 : i32
    %c0_i32_0 = arith.constant 0 : i32
    %c0_i32_1 = arith.constant 0 : i32
    return %c0_i32, %c0_i32_0 : i32, i32
  }
  func.func @transform_6(%arg0: i32) -> (i32, i32) {
    %c0_i32 = arith.constant 0 : i32
    %c0_i32_0 = arith.constant 0 : i32
    %c0_i32_1 = arith.constant 0 : i32
    return %c0_i32, %c0_i32_0 : i32, i32
  }
  func.func @transform_7(%arg0: i32) -> (i32, i32) {
    %c0_i32 = arith.constant 0 : i32
    %c0_i32_0 = arith.constant 0 : i32
    %c0_i32_1 = arith.constant 0 : i32
    return %c0_i32, %c0_i32_0 : i32, i32
  }
  func.func @transform_8(%arg0: i32) -> (i32, i32) {
    %c0_i32 = arith.constant 0 : i32
    %c0_i32_0 = arith.constant 0 : i32
    %c0_i32_1 = arith.constant 0 : i32
    return %c0_i32, %c0_i32_0 : i32, i32
  }
  func.func @transform_9(%arg0: i32) -> (i32, i32) {
    %c0_i32 = arith.constant 0 : i32
    %c0_i32_0 = arith.constant 0 : i32
    %c0_i32_1 = arith.constant 0 : i32
    return %c0_i32, %c0_i32_0 : i32, i32
  }
  func.func @transform_10(%arg0: i32) -> (i32, i32) {
    %c0_i32 = arith.constant 0 : i32
    %c0_i32_0 = arith.constant 0 : i32
    %c0_i32_1 = arith.constant 0 : i32
    return %c0_i32, %c0_i32_0 : i32, i32
  }
  func.func @transform_11(%arg0: i32) -> (i32, i32) {
    %c0_i32 = arith.constant 0 : i32
    %c0_i32_0 = arith.constant 0 : i32
    %c0_i32_1 = arith.constant 0 : i32
    return %c0_i32, %c0_i32_0 : i32, i32
  }
  func.func @transform_12(%arg0: i32) -> (i32, i32) {
    %c0_i32 = arith.constant 0 : i32
    %c0_i32_0 = arith.constant 0 : i32
    %c0_i32_1 = arith.constant 0 : i32
    return %c0_i32, %c0_i32_0 : i32, i32
  }
  func.func @transform_13(%arg0: i32) -> (i32, i32) {
    %c0_i32 = arith.constant 0 : i32
    %c0_i32_0 = arith.constant 0 : i32
    %c0_i32_1 = arith.constant 0 : i32
    return %c0_i32, %c0_i32_0 : i32, i32
  }
  func.func @transform_14(%arg0: i32) -> (i32, i32) {
    %c0_i32 = arith.constant 0 : i32
    %c0_i32_0 = arith.constant 0 : i32
    %c0_i32_1 = arith.constant 0 : i32
    return %c0_i32, %c0_i32_0 : i32, i32
  }
  func.func @transform_15(%arg0: i32) -> (i32, i32) {
    %c0_i32 = arith.constant 0 : i32
    %c0_i32_0 = arith.constant 0 : i32
    %c0_i32_1 = arith.constant 0 : i32
    return %c0_i32, %c0_i32_0 : i32, i32
  }
  func.func @transform_16(%arg0: i32) -> (i32, i32) {
    %c0_i32 = arith.constant 0 : i32
    %c0_i32_0 = arith.constant 0 : i32
    %c0_i32_1 = arith.constant 0 : i32
    return %c0_i32, %c0_i32_0 : i32, i32
  }
  func.func @transform_17(%arg0: i32) -> (i32, i32) {
    %c0_i32 = arith.constant 0 : i32
    %c0_i32_0 = arith.constant 0 : i32
    %c0_i32_1 = arith.constant 0 : i32
    return %c0_i32, %c0_i32_0 : i32, i32
  }
  func.func @transform_18(%arg0: i32) -> (i32, i32) {
    %c0_i32 = arith.constant 0 : i32
    %c0_i32_0 = arith.constant 0 : i32
    %c0_i32_1 = arith.constant 0 : i32
    return %c0_i32, %c0_i32_0 : i32, i32
  }
  func.func @transform_19(%arg0: i32) -> (i32, i32) {
    %c0_i32 = arith.constant 0 : i32
    %c0_i32_0 = arith.constant 0 : i32
    %c0_i32_1 = arith.constant 0 : i32
    return %c0_i32, %c0_i32_0 : i32, i32
  }
  func.func @transform_20(%arg0: i32) -> (i32, i32) {
    %c0_i32 = arith.constant 0 : i32
    %c0_i32_0 = arith.constant 0 : i32
    %c0_i32_1 = arith.constant 0 : i32
    return %c0_i32, %c0_i32_0 : i32, i32
  }
  func.func @transform_21(%arg0: i32) -> (i32, i32) {
    %c0_i32 = arith.constant 0 : i32
    %c0_i32_0 = arith.constant 0 : i32
    %c0_i32_1 = arith.constant 0 : i32
    return %c0_i32, %c0_i32_0 : i32, i32
  }
  func.func @transform_22(%arg0: i32) -> (i32, i32) {
    %c0_i32 = arith.constant 0 : i32
    %c0_i32_0 = arith.constant 0 : i32
    %c0_i32_1 = arith.constant 0 : i32
    return %c0_i32, %c0_i32_0 : i32, i32
  }
  func.func @transform_23(%arg0: i32) -> (i32, i32) {
    %c0_i32 = arith.constant 0 : i32
    %c0_i32_0 = arith.constant 0 : i32
    %c0_i32_1 = arith.constant 0 : i32
    return %c0_i32, %c0_i32_0 : i32, i32
  }
  func.func @transform_24(%arg0: i32) -> (i32, i32) {
    %c0_i32 = arith.constant 0 : i32
    %c0_i32_0 = arith.constant 0 : i32
    %c0_i32_1 = arith.constant 0 : i32
    return %c0_i32, %c0_i32_0 : i32, i32
  }
  func.func @transform_25(%arg0: i32) -> (i32, i32, i32) {
    %c0_i32 = arith.constant 0 : i32
    %c0_i32_0 = arith.constant 0 : i32
    %c0_i32_1 = arith.constant 0 : i32
    return %arg0, %c0_i32, %c0_i32_0 : i32, i32, i32
  }
}

</mosaic_0001>

<llo_original>
// kernel: tpu_custom_call.1
$region0: #{tpu_custom_call.1}
  #allocation0 [shape = 'u32[]', space=smem, size = 0x4, offset = 0x4, fixed_abs, tag = 'smem constant byte address 0x4 - core index']
  #allocation1 [shape = 'u32[72,128]{1,0:T(1,128)}', space=vmem, size = 0x9000, scoped, tag = 'internal scratch']
  %s0 = inlined_call_operand.hbm [shape: f32[2,8,32], index: 0, kind: input, shape index: {}]
  %s1 = inlined_call_operand.hbm [shape: f32[2,8,32], index: 1, kind: input, shape index: {}]
  %s2 = inlined_call_operand.hbm [shape: f32[2,8,32], index: 2, kind: input, shape index: {}]
  %s3 = inlined_call_operand.hbm [shape: f32[8,8], index: 3, kind: input, shape index: {}]
  %s4 = inlined_call_operand.hbm [shape: f32[8,8], index: 4, kind: input, shape index: {}]
  %s5 = inlined_call_operand.vmem [shape: f32[32,32], index: 5, kind: input, shape index: {}]
  %s6 = inlined_call_operand.vmem [shape: f32[32,32], index: 6, kind: input, shape index: {}]
  %s7 = inlined_call_operand.vmem [shape: f32[32,32], index: 7, kind: input, shape index: {}]
  %s8 = inlined_call_operand.hbm [shape: f32[32,32], index: 8, kind: input, shape index: {}]
  %s9 = inlined_call_operand.vmem [shape: f32[1,32], index: 9, kind: input, shape index: {}]
  %s10 = inlined_call_operand.vmem [shape: f32[1,32], index: 10, kind: input, shape index: {}]
  %s11 = inlined_call_operand.vmem [shape: f32[1,32], index: 11, kind: input, shape index: {}]
  %s12 = inlined_call_operand.hbm [shape: f32[32,32], index: 12, kind: input, shape index: {}]
  %s13 = inlined_call_operand.hbm [shape: f32[32,32], index: 13, kind: input, shape index: {}]
  %s14 = inlined_call_operand.hbm [shape: f32[32,32], index: 14, kind: input, shape index: {}]
  %s15 = inlined_call_operand.hbm [shape: f32[32,32], index: 15, kind: input, shape index: {}]
  %s16 = inlined_call_operand.vmem [shape: f32[1,32], index: 16, kind: input, shape index: {}]
  %s17 = inlined_call_operand.vmem [shape: f32[1,32], index: 17, kind: input, shape index: {}]
  %s18 = inlined_call_operand.vmem [shape: f32[1,32], index: 18, kind: input, shape index: {}]
  %s19 = inlined_call_operand.hbm [shape: f32[32,64], index: 19, kind: input, shape index: {}]
  %s20 = inlined_call_operand.vmem [shape: f32[1,64], index: 20, kind: input, shape index: {}]
  %s21 = inlined_call_operand.vmem [shape: f32[64,32], index: 21, kind: input, shape index: {}]
  %s22 = inlined_call_operand.vmem [shape: f32[1,32], index: 22, kind: input, shape index: {}]
  %s23 = inlined_call_operand.vmem [shape: f32[1,32], index: 23, kind: input, shape index: {}]
  %s24 = inlined_call_operand.vmem [shape: f32[1,32], index: 24, kind: input, shape index: {}]
  %s25 = inlined_call_operand.hbm [shape: f32[2,8,32], index: 25, kind: output, shape index: {}]
  %s26 = sld [smem:[#allocation0]]
  $region177: #{tpu_custom_call.1} parent=0
    _
  %s28 = ssub.s32 1, %s26
  %s29 = scalar_select 0, %s28, %s26
  $region1: #{tpu_custom_call.1} parent=0
    #allocation2 [shape = 'u8[8192]{0}', space=vmem, size = 0x2000, scoped, tag = 'input window, operand 0']
    #allocation3 [shape = 's32[2]{0}', space=sflag, size = 0x8, scoped, tag = 'scoped memory for tpu_custom_call.1']
    #allocation4 [shape = 's32[2]{0}', space=sflag, size = 0x8, scoped, tag = 'scoped memory for tpu_custom_call.1']
    #allocation5 [shape = 'u8[8192]{0}', space=vmem, size = 0x2000, scoped, tag = 'input window, operand 1']
    #allocation6 [shape = 's32[2]{0}', space=sflag, size = 0x8, scoped, tag = 'scoped memory for tpu_custom_call.1']
    #allocation7 [shape = 'u8[8192]{0}', space=vmem, size = 0x2000, scoped, tag = 'input window, operand 2']
    #allocation8 [shape = 'u8[4096]{0}', space=vmem, size = 0x1000, scoped, tag = 'input window, operand 3, single buffered']
    #allocation9 [shape = 's32[1]{0}', space=sflag, size = 0x4, scoped, tag = 'scoped memory for tpu_custom_call.1']
    #allocation10 [shape = 'u8[4096]{0}', space=vmem, size = 0x1000, scoped, tag = 'input window, operand 4, single buffered']
    #allocation11 [shape = 'u8[16384]{0}', space=vmem, size = 0x4000, scoped, tag = 'input window, operand 8, single buffered']
    #allocation12 [shape = 's32[1]{0}', space=sflag, size = 0x4, scoped, tag = 'scoped memory for tpu_custom_call.1']
    #allocation13 [shape = 'u8[16384]{0}', space=vmem, size = 0x4000, scoped, tag = 'input window, operand 12, single buffered']
    #allocation14 [shape = 'u8[16384]{0}', space=vmem, size = 0x4000, scoped, tag = 'input window, operand 13, single buffered']
    #allocation15 [shape = 's32[1]{0}', space=sflag, size = 0x4, scoped, tag = 'scoped memory for tpu_custom_call.1']
    #allocation16 [shape = 'u8[16384]{0}', space=vmem, size = 0x4000, scoped, tag = 'input window, operand 14, single buffered']
    #allocation17 [shape = 'u8[16384]{0}', space=vmem, size = 0x4000, scoped, tag = 'input window, operand 15, single buffered']
    #allocation18 [shape = 's32[1]{0}', space=sflag, size = 0x4, scoped, tag = 'scoped memory for tpu_custom_call.1']
    #allocation19 [shape = 'u8[16384]{0}', space=vmem, size = 0x4000, scoped, tag = 'input window, operand 19, single buffered']
    #allocation20 [shape = 'u8[8192]{0}', space=vmem, size = 0x2000, scoped, tag = 'output window, operand 0']
    %30 = vsyncpa [#allocation3], 0
    %s31 = scalar_lea.sflag [#allocation3], 1
    %32 = vsyncpa %s31, 0
    %33 = vsyncpa [#allocation6], 0
    %s34 = scalar_lea.sflag [#allocation6], 1
    %35 = vsyncpa %s34, 0
    %36 = vsyncpa [#allocation9], 0
    %37 = vsyncpa [#allocation12], 0
    %38 = vsyncpa [#allocation15], 0
    %39 = vsyncpa [#allocation18], 0
    %40 = vsyncpa [#allocation4], 0
    %s41 = scalar_lea.sflag [#allocation4], 1
    %42 = vsyncpa %s41, 0
    loop: start=0, step=1, limit=4
    $region2: #{tpu_custom_call.1} parent=1 // loop_pre_header
      _
    $region3: #{tpu_custom_call.1} parent=1 // loop_header
      %s44 = sphi 0, %s48
      %p45 = scmp.ge.s32.totalorder %s44, 4
      %s54 = sphi 0, %s56
      %s57 = sphi 0, %s54
      %s58 = sphi 0, %s57
      %s74 = sphi 0, %s58
      %s80 = sphi 0, %s82
      %s83 = sphi 0, %s80
      %s84 = sphi 0, %s83
      %s100 = sphi 0, %s84
      %s106 = sphi 0, %s108
      %s109 = sphi 0, %s106
      %s110 = sphi 0, %s109
      %s126 = sphi 0, %s110
      %s130 = sphi 0, %s130
      %s132 = sphi 0, %s130
      %s133 = sphi 0, %s132
      %s147 = sphi 0, %s133
      %s151 = sphi 0, %s151
      %s153 = sphi 0, %s151
      %s154 = sphi 0, %s153
      %s168 = sphi 0, %s154
      %s172 = sphi 0, %s172
      %s174 = sphi 0, %s172
      %s175 = sphi 0, %s174
      %s189 = sphi 0, %s175
      %s193 = sphi 0, %s193
      %s195 = sphi 0, %s193
      %s196 = sphi 0, %s195
      %s210 = sphi 0, %s196
      %s214 = sphi 0, %s214
      %s216 = sphi 0, %s214
      %s217 = sphi 0, %s216
      %s231 = sphi 0, %s217
      %s235 = sphi 0, %s235
      %s237 = sphi 0, %s235
      %s238 = sphi 0, %s237
      %s252 = sphi 0, %s238
      %s256 = sphi 0, %s256
      %s258 = sphi 0, %s256
      %s259 = sphi 0, %s258
      %s273 = sphi 0, %s259
      %s277 = sphi 0, %s277
      %s279 = sphi 0, %s277
      %s280 = sphi 0, %s279
      %s294 = sphi 0, %s280
      %s298 = sphi 0, %s298
      %s300 = sphi 0, %s298
      %s301 = sphi 0, %s300
      %s315 = sphi 0, %s301
      %s319 = sphi 0, %s319
      %s321 = sphi 0, %s319
      %s322 = sphi 0, %s321
      %s336 = sphi 0, %s322
      %s340 = sphi 0, %s340
      %s342 = sphi 0, %s340
      %s343 = sphi 0, %s342
      %s357 = sphi 0, %s343
      %s361 = sphi 0, %s361
      %s363 = sphi 0, %s361
      %s364 = sphi 0, %s363
      %s378 = sphi 0, %s364
      %s382 = sphi 0, %s382
      %s384 = sphi 0, %s382
      %s385 = sphi 0, %s384
      %s399 = sphi 0, %s385
      %s403 = sphi 0, %s403
      %s405 = sphi 0, %s403
      %s406 = sphi 0, %s405
      %s420 = sphi 0, %s406
      %s424 = sphi 0, %s424
      %s426 = sphi 0, %s424
      %s427 = sphi 0, %s426
      %s441 = sphi 0, %s427
      %s445 = sphi 0, %s445
      %s447 = sphi 0, %s445
      %s448 = sphi 0, %s447
      %s462 = sphi 0, %s448
      %s466 = sphi 0, %s466
      %s468 = sphi 0, %s466
      %s469 = sphi 0, %s468
      %s483 = sphi 0, %s469
      %s487 = sphi 0, %s487
      %s489 = sphi 0, %s487
      %s490 = sphi 0, %s489
      %s504 = sphi 0, %s490
      %s508 = sphi 0, %s508
      %s510 = sphi 0, %s508
      %s511 = sphi 0, %s510
      %s525 = sphi 0, %s511
      %s529 = sphi 0, %s529
      %s531 = sphi 0, %s529
      %s532 = sphi 0, %s531
      %s546 = sphi 0, %s532
      %s550 = sphi 0, %s550
      %s552 = sphi 0, %s550
      %s553 = sphi 0, %s552
      %s567 = sphi 0, %s553
      %s571 = sphi 0, %s571
      %s573 = sphi 0, %s571
      %s574 = sphi 0, %s573
      %s588 = sphi 0, %s574
      %s594 = sphi 0, %s596
      %s597 = sphi 0, %s594
      %s598 = sphi 0, %s597
      %s614 = sphi 0, %s598
    $region4: #{tpu_custom_call.1} parent=1 // loop_header_branch
      %47 = sbr.rel (%p45) target = $region8
    $region5: #{tpu_custom_call.1} parent=1 // loop_body
      %s49 = ssub.s32 %s44, 1
      %s50 = ssub.s32 %s44, 2
      %s51 = sadd.s32 %s44, 1
      %s52 = ssub.s32 %s44, %s51
      %p53 = scmp.eq.s32.totalorder %s52, 0
      %s55 = sadd.s32 %s54, 1
      %s56 = scalar_select %p53, %s54, %s55
      %p59 = pneg %p53
      %p60 = scmp.eq.s32.totalorder %s44, 1
      %p61 = por %p59, %p60
      %p62 = scmp.ne.s32.totalorder %s54, %s57
      %p63 = scmp.eq.s32.totalorder %s44, 0
      %p64 = por %p62, %p63
      %p65 = scmp.ne.s32.totalorder %s54, %s57
      %p66 = scmp.eq.s32.totalorder %s49, 1
      %p67 = por %p65, %p66
      %p68 = scmp.ne.s32.totalorder %s57, %s58
      %p69 = scmp.eq.s32.totalorder %s49, 0
      %p70 = por %p68, %p69
      %p71 = scmp.ne.s32.totalorder %s57, %s58
      %p72 = scmp.eq.s32.totalorder %s50, 1
      %p73 = por %p71, %p72
      %p75 = scmp.ne.s32.totalorder %s58, %s74
      %p76 = scmp.eq.s32.totalorder %s50, 0
      %p77 = por %p75, %p76
      %s78 = ssub.s32 %s44, %s51
      %p79 = scmp.eq.s32.totalorder %s78, 0
      %s81 = sadd.s32 %s80, 1
      %s82 = scalar_select %p79, %s80, %s81
      %p85 = pneg %p79
      %p86 = scmp.eq.s32.totalorder %s44, 1
      %p87 = por %p85, %p86
      %p88 = scmp.ne.s32.totalorder %s80, %s83
      %p89 = scmp.eq.s32.totalorder %s44, 0
      %p90 = por %p88, %p89
      %p91 = scmp.ne.s32.totalorder %s80, %s83
      %p92 = scmp.eq.s32.totalorder %s49, 1
      %p93 = por %p91, %p92
      %p94 = scmp.ne.s32.totalorder %s83, %s84
      %p95 = scmp.eq.s32.totalorder %s49, 0
      %p96 = por %p94, %p95
      %p97 = scmp.ne.s32.totalorder %s83, %s84
      %p98 = scmp.eq.s32.totalorder %s50, 1
      %p99 = por %p97, %p98
      %p101 = scmp.ne.s32.totalorder %s84, %s100
      %p102 = scmp.eq.s32.totalorder %s50, 0
      %p103 = por %p101, %p102
      %s104 = ssub.s32 %s44, %s51
      %p105 = scmp.eq.s32.totalorder %s104, 0
      %s107 = sadd.s32 %s106, 1
      %s108 = scalar_select %p105, %s106, %s107
      %p111 = pneg %p105
      %p112 = scmp.eq.s32.totalorder %s44, 1
      %p113 = por %p111, %p112
      %p114 = scmp.ne.s32.totalorder %s106, %s109
      %p115 = scmp.eq.s32.totalorder %s44, 0
      %p116 = por %p114, %p115
      %p117 = scmp.ne.s32.totalorder %s106, %s109
      %p118 = scmp.eq.s32.totalorder %s49, 1
      %p119 = por %p117, %p118
      %p120 = scmp.ne.s32.totalorder %s109, %s110
      %p121 = scmp.eq.s32.totalorder %s49, 0
      %p122 = por %p120, %p121
      %p123 = scmp.ne.s32.totalorder %s109, %s110
      %p124 = scmp.eq.s32.totalorder %s50, 1
      %p125 = por %p123, %p124
      %p127 = scmp.ne.s32.totalorder %s110, %s126
      %p128 = scmp.eq.s32.totalorder %s50, 0
      %p129 = por %p127, %p128
      %s131 = sadd.s32 %s130, 1
      %p134 = scmp.eq.s32.totalorder %s44, 1
      %p135 = scmp.ne.s32.totalorder %s130, %s132
      %p136 = scmp.eq.s32.totalorder %s44, 0
      %p137 = por %p135, %p136
      %p138 = scmp.ne.s32.totalorder %s130, %s132
      %p139 = scmp.eq.s32.totalorder %s49, 1
      %p140 = por %p138, %p139
      %p141 = scmp.ne.s32.totalorder %s132, %s133
      %p142 = scmp.eq.s32.totalorder %s49, 0
      %p143 = por %p141, %p142
      %p144 = scmp.ne.s32.totalorder %s132, %s133
      %p145 = scmp.eq.s32.totalorder %s50, 1
      %p146 = por %p144, %p145
      %p148 = scmp.ne.s32.totalorder %s133, %s147
      %p149 = scmp.eq.s32.totalorder %s50, 0
      %p150 = por %p148, %p149
      %s152 = sadd.s32 %s151, 1
      %p155 = scmp.eq.s32.totalorder %s44, 1
      %p156 = scmp.ne.s32.totalorder %s151, %s153
      %p157 = scmp.eq.s32.totalorder %s44, 0
      %p158 = por %p156, %p157
      %p159 = scmp.ne.s32.totalorder %s151, %s153
      %p160 = scmp.eq.s32.totalorder %s49, 1
      %p161 = por %p159, %p160
      %p162 = scmp.ne.s32.totalorder %s153, %s154
      %p163 = scmp.eq.s32.totalorder %s49, 0
      %p164 = por %p162, %p163
      %p165 = scmp.ne.s32.totalorder %s153, %s154
      %p166 = scmp.eq.s32.totalorder %s50, 1
      %p167 = por %p165, %p166
      %p169 = scmp.ne.s32.totalorder %s154, %s168
      %p170 = scmp.eq.s32.totalorder %s50, 0
      %p171 = por %p169, %p170
      %s173 = sadd.s32 %s172, 1
      %p176 = scmp.eq.s32.totalorder %s44, 1
      %p177 = scmp.ne.s32.totalorder %s172, %s174
      %p178 = scmp.eq.s32.totalorder %s44, 0
      %p179 = por %p177, %p178
      %p180 = scmp.ne.s32.totalorder %s172, %s174
      %p181 = scmp.eq.s32.totalorder %s49, 1
      %p182 = por %p180, %p181
      %p183 = scmp.ne.s32.totalorder %s174, %s175
      %p184 = scmp.eq.s32.totalorder %s49, 0
      %p185 = por %p183, %p184
      %p186 = scmp.ne.s32.totalorder %s174, %s175
      %p187 = scmp.eq.s32.totalorder %s50, 1
      %p188 = por %p186, %p187
      %p190 = scmp.ne.s32.totalorder %s175, %s189
      %p191 = scmp.eq.s32.totalorder %s50, 0
      %p192 = por %p190, %p191
      %s194 = sadd.s32 %s193, 1
      %p197 = scmp.eq.s32.totalorder %s44, 1
      %p198 = scmp.ne.s32.totalorder %s193, %s195
      %p199 = scmp.eq.s32.totalorder %s44, 0
      %p200 = por %p198, %p199
      %p201 = scmp.ne.s32.totalorder %s193, %s195
      %p202 = scmp.eq.s32.totalorder %s49, 1
      %p203 = por %p201, %p202
      %p204 = scmp.ne.s32.totalorder %s195, %s196
      %p205 = scmp.eq.s32.totalorder %s49, 0
      %p206 = por %p204, %p205
      %p207 = scmp.ne.s32.totalorder %s195, %s196
      %p208 = scmp.eq.s32.totalorder %s50, 1
      %p209 = por %p207, %p208
      %p211 = scmp.ne.s32.totalorder %s196, %s210
      %p212 = scmp.eq.s32.totalorder %s50, 0
      %p213 = por %p211, %p212
      %s215 = sadd.s32 %s214, 1
      %p218 = scmp.eq.s32.totalorder %s44, 1
      %p219 = scmp.ne.s32.totalorder %s214, %s216
      %p220 = scmp.eq.s32.totalorder %s44, 0
      %p221 = por %p219, %p220
      %p222 = scmp.ne.s32.totalorder %s214, %s216
      %p223 = scmp.eq.s32.totalorder %s49, 1
      %p224 = por %p222, %p223
      %p225 = scmp.ne.s32.totalorder %s216, %s217
      %p226 = scmp.eq.s32.totalorder %s49, 0
      %p227 = por %p225, %p226
      %p228 = scmp.ne.s32.totalorder %s216, %s217
      %p229 = scmp.eq.s32.totalorder %s50, 1
      %p230 = por %p228, %p229
      %p232 = scmp.ne.s32.totalorder %s217, %s231
      %p233 = scmp.eq.s32.totalorder %s50, 0
      %p234 = por %p232, %p233
      %s236 = sadd.s32 %s235, 1
      %p239 = scmp.eq.s32.totalorder %s44, 1
      %p240 = scmp.ne.s32.totalorder %s235, %s237
      %p241 = scmp.eq.s32.totalorder %s44, 0
      %p242 = por %p240, %p241
      %p243 = scmp.ne.s32.totalorder %s235, %s237
      %p244 = scmp.eq.s32.totalorder %s49, 1
      %p245 = por %p243, %p244
      %p246 = scmp.ne.s32.totalorder %s237, %s238
      %p247 = scmp.eq.s32.totalorder %s49, 0
      %p248 = por %p246, %p247
      %p249 = scmp.ne.s32.totalorder %s237, %s238
      %p250 = scmp.eq.s32.totalorder %s50, 1
      %p251 = por %p249, %p250
      %p253 = scmp.ne.s32.totalorder %s238, %s252
      %p254 = scmp.eq.s32.totalorder %s50, 0
      %p255 = por %p253, %p254
      %s257 = sadd.s32 %s256, 1
      %p260 = scmp.eq.s32.totalorder %s44, 1
      %p261 = scmp.ne.s32.totalorder %s256, %s258
      %p262 = scmp.eq.s32.totalorder %s44, 0
      %p263 = por %p261, %p262
      %p264 = scmp.ne.s32.totalorder %s256, %s258
      %p265 = scmp.eq.s32.totalorder %s49, 1
      %p266 = por %p264, %p265
      %p267 = scmp.ne.s32.totalorder %s258, %s259
      %p268 = scmp.eq.s32.totalorder %s49, 0
      %p269 = por %p267, %p268
      %p270 = scmp.ne.s32.totalorder %s258, %s259
      %p271 = scmp.eq.s32.totalorder %s50, 1
      %p272 = por %p270, %p271
      %p274 = scmp.ne.s32.totalorder %s259, %s273
      %p275 = scmp.eq.s32.totalorder %s50, 0
      %p276 = por %p274, %p275
      %s278 = sadd.s32 %s277, 1
      %p281 = scmp.eq.s32.totalorder %s44, 1
      %p282 = scmp.ne.s32.totalorder %s277, %s279
      %p283 = scmp.eq.s32.totalorder %s44, 0
      %p284 = por %p282, %p283
      %p285 = scmp.ne.s32.totalorder %s277, %s279
      %p286 = scmp.eq.s32.totalorder %s49, 1
      %p287 = por %p285, %p286
      %p288 = scmp.ne.s32.totalorder %s279, %s280
      %p289 = scmp.eq.s32.totalorder %s49, 0
      %p290 = por %p288, %p289
      %p291 = scmp.ne.s32.totalorder %s279, %s280
      %p292 = scmp.eq.s32.totalorder %s50, 1
      %p293 = por %p291, %p292
      %p295 = scmp.ne.s32.totalorder %s280, %s294
      %p296 = scmp.eq.s32.totalorder %s50, 0
      %p297 = por %p295, %p296
      %s299 = sadd.s32 %s298, 1
      %p302 = scmp.eq.s32.totalorder %s44, 1
      %p303 = scmp.ne.s32.totalorder %s298, %s300
      %p304 = scmp.eq.s32.totalorder %s44, 0
      %p305 = por %p303, %p304
      %p306 = scmp.ne.s32.totalorder %s298, %s300
      %p307 = scmp.eq.s32.totalorder %s49, 1
      %p308 = por %p306, %p307
      %p309 = scmp.ne.s32.totalorder %s300, %s301
      %p310 = scmp.eq.s32.totalorder %s49, 0
      %p311 = por %p309, %p310
      %p312 = scmp.ne.s32.totalorder %s300, %s301
      %p313 = scmp.eq.s32.totalorder %s50, 1
      %p314 = por %p312, %p313
      %p316 = scmp.ne.s32.totalorder %s301, %s315
      %p317 = scmp.eq.s32.totalorder %s50, 0
      %p318 = por %p316, %p317
      %s320 = sadd.s32 %s319, 1
      %p323 = scmp.eq.s32.totalorder %s44, 1
      %p324 = scmp.ne.s32.totalorder %s319, %s321
      %p325 = scmp.eq.s32.totalorder %s44, 0
      %p326 = por %p324, %p325
      %p327 = scmp.ne.s32.totalorder %s319, %s321
      %p328 = scmp.eq.s32.totalorder %s49, 1
      %p329 = por %p327, %p328
      %p330 = scmp.ne.s32.totalorder %s321, %s322
      %p331 = scmp.eq.s32.totalorder %s49, 0
      %p332 = por %p330, %p331
      %p333 = scmp.ne.s32.totalorder %s321, %s322
      %p334 = scmp.eq.s32.totalorder %s50, 1
      %p335 = por %p333, %p334
      %p337 = scmp.ne.s32.totalorder %s322, %s336
      %p338 = scmp.eq.s32.totalorder %s50, 0
      %p339 = por %p337, %p338
      %s341 = sadd.s32 %s340, 1
      %p344 = scmp.eq.s32.totalorder %s44, 1
      %p345 = scmp.ne.s32.totalorder %s340, %s342
      %p346 = scmp.eq.s32.totalorder %s44, 0
      %p347 = por %p345, %p346
      %p348 = scmp.ne.s32.totalorder %s340, %s342
      %p349 = scmp.eq.s32.totalorder %s49, 1
      %p350 = por %p348, %p349
      %p351 = scmp.ne.s32.totalorder %s342, %s343
      %p352 = scmp.eq.s32.totalorder %s49, 0
      %p353 = por %p351, %p352
      %p354 = scmp.ne.s32.totalorder %s342, %s343
      %p355 = scmp.eq.s32.totalorder %s50, 1
      %p356 = por %p354, %p355
      %p358 = scmp.ne.s32.totalorder %s343, %s357
      %p359 = scmp.eq.s32.totalorder %s50, 0
      %p360 = por %p358, %p359
      %s362 = sadd.s32 %s361, 1
      %p365 = scmp.eq.s32.totalorder %s44, 1
      %p366 = scmp.ne.s32.totalorder %s361, %s363
      %p367 = scmp.eq.s32.totalorder %s44, 0
      %p368 = por %p366, %p367
      %p369 = scmp.ne.s32.totalorder %s361, %s363
      %p370 = scmp.eq.s32.totalorder %s49, 1
      %p371 = por %p369, %p370
      %p372 = scmp.ne.s32.totalorder %s363, %s364
      %p373 = scmp.eq.s32.totalorder %s49, 0
      %p374 = por %p372, %p373
      %p375 = scmp.ne.s32.totalorder %s363, %s364
      %p376 = scmp.eq.s32.totalorder %s50, 1
      %p377 = por %p375, %p376
      %p379 = scmp.ne.s32.totalorder %s364, %s378
      %p380 = scmp.eq.s32.totalorder %s50, 0
      %p381 = por %p379, %p380
      %s383 = sadd.s32 %s382, 1
      %p386 = scmp.eq.s32.totalorder %s44, 1
      %p387 = scmp.ne.s32.totalorder %s382, %s384
      %p388 = scmp.eq.s32.totalorder %s44, 0
      %p389 = por %p387, %p388
      %p390 = scmp.ne.s32.totalorder %s382, %s384
      %p391 = scmp.eq.s32.totalorder %s49, 1
      %p392 = por %p390, %p391
      %p393 = scmp.ne.s32.totalorder %s384, %s385
      %p394 = scmp.eq.s32.totalorder %s49, 0
      %p395 = por %p393, %p394
      %p396 = scmp.ne.s32.totalorder %s384, %s385
      %p397 = scmp.eq.s32.totalorder %s50, 1
      %p398 = por %p396, %p397
      %p400 = scmp.ne.s32.totalorder %s385, %s399
      %p401 = scmp.eq.s32.totalorder %s50, 0
      %p402 = por %p400, %p401
      %s404 = sadd.s32 %s403, 1
      %p407 = scmp.eq.s32.totalorder %s44, 1
      %p408 = scmp.ne.s32.totalorder %s403, %s405
      %p409 = scmp.eq.s32.totalorder %s44, 0
      %p410 = por %p408, %p409
      %p411 = scmp.ne.s32.totalorder %s403, %s405
      %p412 = scmp.eq.s32.totalorder %s49, 1
      %p413 = por %p411, %p412
      %p414 = scmp.ne.s32.totalorder %s405, %s406
      %p415 = scmp.eq.s32.totalorder %s49, 0
      %p416 = por %p414, %p415
      %p417 = scmp.ne.s32.totalorder %s405, %s406
      %p418 = scmp.eq.s32.totalorder %s50, 1
      %p419 = por %p417, %p418
      %p421 = scmp.ne.s32.totalorder %s406, %s420
      %p422 = scmp.eq.s32.totalorder %s50, 0
      %p423 = por %p421, %p422
      %s425 = sadd.s32 %s424, 1
      %p428 = scmp.eq.s32.totalorder %s44, 1
      %p429 = scmp.ne.s32.totalorder %s424, %s426
      %p430 = scmp.eq.s32.totalorder %s44, 0
      %p431 = por %p429, %p430
      %p432 = scmp.ne.s32.totalorder %s424, %s426
      %p433 = scmp.eq.s32.totalorder %s49, 1
      %p434 = por %p432, %p433
      %p435 = scmp.ne.s32.totalorder %s426, %s427
      %p436 = scmp.eq.s32.totalorder %s49, 0
      %p437 = por %p435, %p436
      %p438 = scmp.ne.s32.totalorder %s426, %s427
      %p439 = scmp.eq.s32.totalorder %s50, 1
      %p440 = por %p438, %p439
      %p442 = scmp.ne.s32.totalorder %s427, %s441
      %p443 = scmp.eq.s32.totalorder %s50, 0
      %p444 = por %p442, %p443
      %s446 = sadd.s32 %s445, 1
      %p449 = scmp.eq.s32.totalorder %s44, 1
      %p450 = scmp.ne.s32.totalorder %s445, %s447
      %p451 = scmp.eq.s32.totalorder %s44, 0
      %p452 = por %p450, %p451
      %p453 = scmp.ne.s32.totalorder %s445, %s447
      %p454 = scmp.eq.s32.totalorder %s49, 1
      %p455 = por %p453, %p454
      %p456 = scmp.ne.s32.totalorder %s447, %s448
      %p457 = scmp.eq.s32.totalorder %s49, 0
      %p458 = por %p456, %p457
      %p459 = scmp.ne.s32.totalorder %s447, %s448
      %p460 = scmp.eq.s32.totalorder %s50, 1
      %p461 = por %p459, %p460
      %p463 = scmp.ne.s32.totalorder %s448, %s462
      %p464 = scmp.eq.s32.totalorder %s50, 0
      %p465 = por %p463, %p464
      %s467 = sadd.s32 %s466, 1
      %p470 = scmp.eq.s32.totalorder %s44, 1
      %p471 = scmp.ne.s32.totalorder %s466, %s468
      %p472 = scmp.eq.s32.totalorder %s44, 0
      %p473 = por %p471, %p472
      %p474 = scmp.ne.s32.totalorder %s466, %s468
      %p475 = scmp.eq.s32.totalorder %s49, 1
      %p476 = por %p474, %p475
      %p477 = scmp.ne.s32.totalorder %s468, %s469
      %p478 = scmp.eq.s32.totalorder %s49, 0
      %p479 = por %p477, %p478
      %p480 = scmp.ne.s32.totalorder %s468, %s469
      %p481 = scmp.eq.s32.totalorder %s50, 1
      %p482 = por %p480, %p481
      %p484 = scmp.ne.s32.totalorder %s469, %s483
      %p485 = scmp.eq.s32.totalorder %s50, 0
      %p486 = por %p484, %p485
      %s488 = sadd.s32 %s487, 1
      %p491 = scmp.eq.s32.totalorder %s44, 1
      %p492 = scmp.ne.s32.totalorder %s487, %s489
      %p493 = scmp.eq.s32.totalorder %s44, 0
      %p494 = por %p492, %p493
      %p495 = scmp.ne.s32.totalorder %s487, %s489
      %p496 = scmp.eq.s32.totalorder %s49, 1
      %p497 = por %p495, %p496
      %p498 = scmp.ne.s32.totalorder %s489, %s490
      %p499 = scmp.eq.s32.totalorder %s49, 0
      %p500 = por %p498, %p499
      %p501 = scmp.ne.s32.totalorder %s489, %s490
      %p502 = scmp.eq.s32.totalorder %s50, 1
      %p503 = por %p501, %p502
      %p505 = scmp.ne.s32.totalorder %s490, %s504
      %p506 = scmp.eq.s32.totalorder %s50, 0
      %p507 = por %p505, %p506
      %s509 = sadd.s32 %s508, 1
      %p512 = scmp.eq.s32.totalorder %s44, 1
      %p513 = scmp.ne.s32.totalorder %s508, %s510
      %p514 = scmp.eq.s32.totalorder %s44, 0
      %p515 = por %p513, %p514
      %p516 = scmp.ne.s32.totalorder %s508, %s510
      %p517 = scmp.eq.s32.totalorder %s49, 1
      %p518 = por %p516, %p517
      %p519 = scmp.ne.s32.totalorder %s510, %s511
      %p520 = scmp.eq.s32.totalorder %s49, 0
      %p521 = por %p519, %p520
      %p522 = scmp.ne.s32.totalorder %s510, %s511
      %p523 = scmp.eq.s32.totalorder %s50, 1
      %p524 = por %p522, %p523
      %p526 = scmp.ne.s32.totalorder %s511, %s525
      %p527 = scmp.eq.s32.totalorder %s50, 0
      %p528 = por %p526, %p527
      %s530 = sadd.s32 %s529, 1
      %p533 = scmp.eq.s32.totalorder %s44, 1
      %p534 = scmp.ne.s32.totalorder %s529, %s531
      %p535 = scmp.eq.s32.totalorder %s44, 0
      %p536 = por %p534, %p535
      %p537 = scmp.ne.s32.totalorder %s529, %s531
      %p538 = scmp.eq.s32.totalorder %s49, 1
      %p539 = por %p537, %p538
      %p540 = scmp.ne.s32.totalorder %s531, %s532
      %p541 = scmp.eq.s32.totalorder %s49, 0
      %p542 = por %p540, %p541
      %p543 = scmp.ne.s32.totalorder %s531, %s532
      %p544 = scmp.eq.s32.totalorder %s50, 1
      %p545 = por %p543, %p544
      %p547 = scmp.ne.s32.totalorder %s532, %s546
      %p548 = scmp.eq.s32.totalorder %s50, 0
      %p549 = por %p547, %p548
      %s551 = sadd.s32 %s550, 1
      %p554 = scmp.eq.s32.totalorder %s44, 1
      %p555 = scmp.ne.s32.totalorder %s550, %s552
      %p556 = scmp.eq.s32.totalorder %s44, 0
      %p557 = por %p555, %p556
      %p558 = scmp.ne.s32.totalorder %s550, %s552
      %p559 = scmp.eq.s32.totalorder %s49, 1
      %p560 = por %p558, %p559
      %p561 = scmp.ne.s32.totalorder %s552, %s553
      %p562 = scmp.eq.s32.totalorder %s49, 0
      %p563 = por %p561, %p562
      %p564 = scmp.ne.s32.totalorder %s552, %s553
      %p565 = scmp.eq.s32.totalorder %s50, 1
      %p566 = por %p564, %p565
      %p568 = scmp.ne.s32.totalorder %s553, %s567
      %p569 = scmp.eq.s32.totalorder %s50, 0
      %p570 = por %p568, %p569
      %s572 = sadd.s32 %s571, 1
      %p575 = scmp.eq.s32.totalorder %s44, 1
      %p576 = scmp.ne.s32.totalorder %s571, %s573
      %p577 = scmp.eq.s32.totalorder %s44, 0
      %p578 = por %p576, %p577
      %p579 = scmp.ne.s32.totalorder %s571, %s573
      %p580 = scmp.eq.s32.totalorder %s49, 1
      %p581 = por %p579, %p580
      %p582 = scmp.ne.s32.totalorder %s573, %s574
      %p583 = scmp.eq.s32.totalorder %s49, 0
      %p584 = por %p582, %p583
      %p585 = scmp.ne.s32.totalorder %s573, %s574
      %p586 = scmp.eq.s32.totalorder %s50, 1
      %p587 = por %p585, %p586
      %p589 = scmp.ne.s32.totalorder %s574, %s588
      %p590 = scmp.eq.s32.totalorder %s50, 0
      %p591 = por %p589, %p590
      %s592 = ssub.s32 %s44, %s51
      %p593 = scmp.eq.s32.totalorder %s592, 0
      %s595 = sadd.s32 %s594, 1
      %s596 = scalar_select %p593, %s594, %s595
      %p599 = pneg %p593
      %p600 = scmp.eq.s32.totalorder %s44, 1
      %p601 = por %p599, %p600
      %p602 = scmp.ne.s32.totalorder %s594, %s597
      %p603 = scmp.eq.s32.totalorder %s44, 0
      %p604 = por %p602, %p603
      %p605 = scmp.ne.s32.totalorder %s594, %s597
      %p606 = scmp.eq.s32.totalorder %s49, 1
      %p607 = por %p605, %p606
      %p608 = scmp.ne.s32.totalorder %s597, %s598
      %p609 = scmp.eq.s32.totalorder %s49, 0
      %p610 = por %p608, %p609
      %p611 = scmp.ne.s32.totalorder %s597, %s598
      %p612 = scmp.eq.s32.totalorder %s50, 1
      %p613 = por %p611, %p612
      %p615 = scmp.ne.s32.totalorder %s598, %s614
      %p616 = scmp.eq.s32.totalorder %s50, 0
      %p617 = por %p615, %p616
      %p618 = scmp.le.s32.totalorder 1, %s44
      %p619 = scmp.lt.s32.totalorder %s44, 3
      %p620 = pnand %p618, %p619
      %p621 = pneg %p620
      // Predicated region
      $region9: #{tpu_custom_call.1} parent=5 // pred_check
        _
      $region10: #{tpu_custom_call.1} parent=5 // pred_check_branch
        %623 = sbr.rel (%p620) target = $region12
      $region11: #{tpu_custom_call.1} parent=5 // pred_region
        %s624 = ssub.s32 %s44, 1
        // Predicated region
        $region13: #{tpu_custom_call.1} parent=11 // pred_check
          %p625 = pneg %p143
        $region14: #{tpu_custom_call.1} parent=11 // pred_check_branch
          %627 = sbr.rel (%p625) target = $region16
        $region15: #{tpu_custom_call.1} parent=11 // pred_region
          %629 = vsyncadd [#allocation9], 0
          %s631 = sshll.u32 %s3, 4
          %s632 = int_to_ptr.hbm [resolvable:$true] %s631
          %s633 = sshll.u32 [#allocation8], 4
          %s634 = int_to_ptr.vmem [resolvable:$true] %s633
          %636 = dma.hbm_to_vmem [thread:$0]  %s632, 128, %s634, [#allocation9]
        $region16: #{tpu_custom_call.1} parent=11 // pred_fallthru
          _
        // Predicated region
        $region17: #{tpu_custom_call.1} parent=11 // pred_check
          %p637 = pneg %p164
        $region18: #{tpu_custom_call.1} parent=11 // pred_check_branch
          %639 = sbr.rel (%p637) target = $region20
        $region19: #{tpu_custom_call.1} parent=11 // pred_region
          %641 = vsyncadd [#allocation9], 0
          %s643 = sshll.u32 %s4, 4
          %s644 = int_to_ptr.hbm [resolvable:$true] %s643
          %s645 = sshll.u32 [#allocation10], 4
          %s646 = int_to_ptr.vmem [resolvable:$true] %s645
          %648 = dma.hbm_to_vmem [thread:$0]  %s644, 128, %s646, [#allocation9]
        $region20: #{tpu_custom_call.1} parent=11 // pred_fallthru
          _
        // Predicated region
        $region21: #{tpu_custom_call.1} parent=11 // pred_check
          %p649 = pneg %p185
        $region22: #{tpu_custom_call.1} parent=11 // pred_check_branch
          %651 = sbr.rel (%p649) target = $region24
        $region23: #{tpu_custom_call.1} parent=11 // pred_region
          _
        $region24: #{tpu_custom_call.1} parent=11 // pred_fallthru
          _
        // Predicated region
        $region25: #{tpu_custom_call.1} parent=11 // pred_check
          %p652 = pneg %p206
        $region26: #{tpu_custom_call.1} parent=11 // pred_check_branch
          %654 = sbr.rel (%p652) target = $region28
        $region27: #{tpu_custom_call.1} parent=11 // pred_region
          _
        $region28: #{tpu_custom_call.1} parent=11 // pred_fallthru
          _
        // Predicated region
        $region29: #{tpu_custom_call.1} parent=11 // pred_check
          %p655 = pneg %p227
        $region30: #{tpu_custom_call.1} parent=11 // pred_check_branch
          %657 = sbr.rel (%p655) target = $region32
        $region31: #{tpu_custom_call.1} parent=11 // pred_region
          _
        $region32: #{tpu_custom_call.1} parent=11 // pred_fallthru
          _
        // Predicated region
        $region33: #{tpu_custom_call.1} parent=11 // pred_check
          %p658 = pneg %p248
        $region34: #{tpu_custom_call.1} parent=11 // pred_check_branch
          %660 = sbr.rel (%p658) target = $region36
        $region35: #{tpu_custom_call.1} parent=11 // pred_region
          %662 = vsyncadd [#allocation12], 0
          %s663 = sshll.u32 %s8, 4
          %s664 = int_to_ptr.hbm [resolvable:$true] %s663
          %s665 = sshll.u32 [#allocation11], 4
          %s666 = int_to_ptr.vmem [resolvable:$true] %s665
          %671 = dma.hbm_to_vmem [thread:$0]  %s664, 512, %s666, [#allocation12], 128, 128, 8
        $region36: #{tpu_custom_call.1} parent=11 // pred_fallthru
          _
        // Predicated region
        $region37: #{tpu_custom_call.1} parent=11 // pred_check
          %p672 = pneg %p269
        $region38: #{tpu_custom_call.1} parent=11 // pred_check_branch
          %674 = sbr.rel (%p672) target = $region40
        $region39: #{tpu_custom_call.1} parent=11 // pred_region
          _
        $region40: #{tpu_custom_call.1} parent=11 // pred_fallthru
          _
        // Predicated region
        $region41: #{tpu_custom_call.1} parent=11 // pred_check
          %p675 = pneg %p290
        $region42: #{tpu_custom_call.1} parent=11 // pred_check_branch
          %677 = sbr.rel (%p675) target = $region44
        $region43: #{tpu_custom_call.1} parent=11 // pred_region
          _
        $region44: #{tpu_custom_call.1} parent=11 // pred_fallthru
          _
        // Predicated region
        $region45: #{tpu_custom_call.1} parent=11 // pred_check
          %p678 = pneg %p311
        $region46: #{tpu_custom_call.1} parent=11 // pred_check_branch
          %680 = sbr.rel (%p678) target = $region48
        $region47: #{tpu_custom_call.1} parent=11 // pred_region
          _
        $region48: #{tpu_custom_call.1} parent=11 // pred_fallthru
          _
        // Predicated region
        $region49: #{tpu_custom_call.1} parent=11 // pred_check
          %p681 = pneg %p332
        $region50: #{tpu_custom_call.1} parent=11 // pred_check_branch
          %683 = sbr.rel (%p681) target = $region52
        $region51: #{tpu_custom_call.1} parent=11 // pred_region
          %685 = vsyncadd [#allocation12], 0
          %s686 = sshll.u32 %s12, 4
          %s687 = int_to_ptr.hbm [resolvable:$true] %s686
          %s688 = sshll.u32 [#allocation13], 4
          %s689 = int_to_ptr.vmem [resolvable:$true] %s688
          %694 = dma.hbm_to_vmem [thread:$0]  %s687, 512, %s689, [#allocation12], 128, 128, 8
        $region52: #{tpu_custom_call.1} parent=11 // pred_fallthru
          _
        // Predicated region
        $region53: #{tpu_custom_call.1} parent=11 // pred_check
          %p695 = pneg %p353
        $region54: #{tpu_custom_call.1} parent=11 // pred_check_branch
          %697 = sbr.rel (%p695) target = $region56
        $region55: #{tpu_custom_call.1} parent=11 // pred_region
          %699 = vsyncadd [#allocation15], 0
          %s700 = sshll.u32 %s13, 4
          %s701 = int_to_ptr.hbm [resolvable:$true] %s700
          %s702 = sshll.u32 [#allocation14], 4
          %s703 = int_to_ptr.vmem [resolvable:$true] %s702
          %708 = dma.hbm_to_vmem [thread:$0]  %s701, 512, %s703, [#allocation15], 128, 128, 8
        $region56: #{tpu_custom_call.1} parent=11 // pred_fallthru
          _
        // Predicated region
        $region57: #{tpu_custom_call.1} parent=11 // pred_check
          %p709 = pneg %p374
        $region58: #{tpu_custom_call.1} parent=11 // pred_check_branch
          %711 = sbr.rel (%p709) target = $region60
        $region59: #{tpu_custom_call.1} parent=11 // pred_region
          %713 = vsyncadd [#allocation15], 0
          %s714 = sshll.u32 %s14, 4
          %s715 = int_to_ptr.hbm [resolvable:$true] %s714
          %s716 = sshll.u32 [#allocation16], 4
          %s717 = int_to_ptr.vmem [resolvable:$true] %s716
          %722 = dma.hbm_to_vmem [thread:$0]  %s715, 512, %s717, [#allocation15], 128, 128, 8
        $region60: #{tpu_custom_call.1} parent=11 // pred_fallthru
          _
        // Predicated region
        $region61: #{tpu_custom_call.1} parent=11 // pred_check
          %p723 = pneg %p395
        $region62: #{tpu_custom_call.1} parent=11 // pred_check_branch
          %725 = sbr.rel (%p723) target = $region64
        $region63: #{tpu_custom_call.1} parent=11 // pred_region
          %727 = vsyncadd [#allocation18], 0
          %s728 = sshll.u32 %s15, 4
          %s729 = int_to_ptr.hbm [resolvable:$true] %s728
          %s730 = sshll.u32 [#allocation17], 4
          %s731 = int_to_ptr.vmem [resolvable:$true] %s730
          %736 = dma.hbm_to_vmem [thread:$0]  %s729, 512, %s731, [#allocation18], 128, 128, 8
        $region64: #{tpu_custom_call.1} parent=11 // pred_fallthru
          _
        // Predicated region
        $region65: #{tpu_custom_call.1} parent=11 // pred_check
          %p737 = pneg %p416
        $region66: #{tpu_custom_call.1} parent=11 // pred_check_branch
          %739 = sbr.rel (%p737) target = $region68
        $region67: #{tpu_custom_call.1} parent=11 // pred_region
          _
        $region68: #{tpu_custom_call.1} parent=11 // pred_fallthru
          _
        // Predicated region
        $region69: #{tpu_custom_call.1} parent=11 // pred_check
          %p740 = pneg %p437
        $region70: #{tpu_custom_call.1} parent=11 // pred_check_branch
          %742 = sbr.rel (%p740) target = $region72
        $region71: #{tpu_custom_call.1} parent=11 // pred_region
          _
        $region72: #{tpu_custom_call.1} parent=11 // pred_fallthru
          _
        // Predicated region
        $region73: #{tpu_custom_call.1} parent=11 // pred_check
          %p743 = pneg %p458
        $region74: #{tpu_custom_call.1} parent=11 // pred_check_branch
          %745 = sbr.rel (%p743) target = $region76
        $region75: #{tpu_custom_call.1} parent=11 // pred_region
          _
        $region76: #{tpu_custom_call.1} parent=11 // pred_fallthru
          _
        // Predicated region
        $region77: #{tpu_custom_call.1} parent=11 // pred_check
          %p746 = pneg %p479
        $region78: #{tpu_custom_call.1} parent=11 // pred_check_branch
          %748 = sbr.rel (%p746) target = $region80
        $region79: #{tpu_custom_call.1} parent=11 // pred_region
          %750 = vsyncadd [#allocation18], 0
          %s751 = sshll.u32 %s19, 4
          %s752 = int_to_ptr.hbm [resolvable:$true] %s751
          %s753 = sshll.u32 [#allocation19], 4
          %s754 = int_to_ptr.vmem [resolvable:$true] %s753
          %759 = dma.hbm_to_vmem [thread:$0]  %s752, 512, %s754, [#allocation18], 128, 128, 8
        $region80: #{tpu_custom_call.1} parent=11 // pred_fallthru
          _
        // Predicated region
        $region81: #{tpu_custom_call.1} parent=11 // pred_check
          %p760 = pneg %p500
        $region82: #{tpu_custom_call.1} parent=11 // pred_check_branch
          %762 = sbr.rel (%p760) target = $region84
        $region83: #{tpu_custom_call.1} parent=11 // pred_region
          _
        $region84: #{tpu_custom_call.1} parent=11 // pred_fallthru
          _
        // Predicated region
        $region85: #{tpu_custom_call.1} parent=11 // pred_check
          %p763 = pneg %p521
        $region86: #{tpu_custom_call.1} parent=11 // pred_check_branch
          %765 = sbr.rel (%p763) target = $region88
        $region87: #{tpu_custom_call.1} parent=11 // pred_region
          _
        $region88: #{tpu_custom_call.1} parent=11 // pred_fallthru
          _
        // Predicated region
        $region89: #{tpu_custom_call.1} parent=11 // pred_check
          %p766 = pneg %p542
        $region90: #{tpu_custom_call.1} parent=11 // pred_check_branch
          %768 = sbr.rel (%p766) target = $region92
        $region91: #{tpu_custom_call.1} parent=11 // pred_region
          _
        $region92: #{tpu_custom_call.1} parent=11 // pred_fallthru
          _
        // Predicated region
        $region93: #{tpu_custom_call.1} parent=11 // pred_check
          %p769 = pneg %p563
        $region94: #{tpu_custom_call.1} parent=11 // pred_check_branch
          %771 = sbr.rel (%p769) target = $region96
        $region95: #{tpu_custom_call.1} parent=11 // pred_region
          _
        $region96: #{tpu_custom_call.1} parent=11 // pred_fallthru
          _
        // Predicated region
        $region97: #{tpu_custom_call.1} parent=11 // pred_check
          %p772 = pneg %p584
        $region98: #{tpu_custom_call.1} parent=11 // pred_check_branch
          %774 = sbr.rel (%p772) target = $region100
        $region99: #{tpu_custom_call.1} parent=11 // pred_region
          _
        $region100: #{tpu_custom_call.1} parent=11 // pred_fallthru
          _
      $region12: #{tpu_custom_call.1} parent=5 // pred_fallthru
        _
      %p775 = scmp.lt.s32.totalorder %s44, 2
      // Predicated region
      $region101: #{tpu_custom_call.1} parent=5 // pred_check
        %p776 = pneg %p775
      $region102: #{tpu_custom_call.1} parent=5 // pred_check_branch
        %778 = sbr.rel (%p776) target = $region104
      $region103: #{tpu_custom_call.1} parent=5 // pred_region
        // Predicated region
        $region105: #{tpu_custom_call.1} parent=103 // pred_check
          %p779 = pneg %p64
        $region106: #{tpu_custom_call.1} parent=103 // pred_check_branch
          %781 = sbr.rel (%p779) target = $region108
        $region107: #{tpu_custom_call.1} parent=103 // pred_region
          %s782 = sand.u32 %s54, 1
          %s783 = scalar_lea.sflag [#allocation3], %s782
          %s784 = sand.u32 %s54, 1
          %s785 = smul.addr %s784, 8
          %s786 = scalar_lea.vmem [#allocation2], %s785
          %788 = vsyncadd %s783, 0
          %s789 = smul.addr %s44, 8
          %s790 = scalar_lea.hbm %s0, %s789
          %s792 = sshll.u32 %s790, 4
          %s793 = int_to_ptr.hbm [resolvable:$true] %s792
          %s794 = sshll.u32 %s786, 4
          %s795 = int_to_ptr.vmem [resolvable:$true] %s794
          %797 = dma.hbm_to_vmem [thread:$0]  %s793, 128, %s795, %s783
        $region108: #{tpu_custom_call.1} parent=103 // pred_fallthru
          _
        // Predicated region
        $region109: #{tpu_custom_call.1} parent=103 // pred_check
          %p798 = pneg %p90
        $region110: #{tpu_custom_call.1} parent=103 // pred_check_branch
          %800 = sbr.rel (%p798) target = $region112
        $region111: #{tpu_custom_call.1} parent=103 // pred_region
          %s801 = sand.u32 %s44, 1
          %s802 = scalar_lea.sflag [#allocation6], %s801
          %s803 = sand.u32 %s80, 1
          %s804 = smul.addr %s803, 8
          %s805 = scalar_lea.vmem [#allocation5], %s804
          %807 = vsyncadd %s802, 0
          %s808 = smul.addr %s44, 8
          %s809 = scalar_lea.hbm %s1, %s808
          %s811 = sshll.u32 %s809, 4
          %s812 = int_to_ptr.hbm [resolvable:$true] %s811
          %s813 = sshll.u32 %s805, 4
          %s814 = int_to_ptr.vmem [resolvable:$true] %s813
          %816 = dma.hbm_to_vmem [thread:$0]  %s812, 128, %s814, %s802
        $region112: #{tpu_custom_call.1} parent=103 // pred_fallthru
          _
        // Predicated region
        $region113: #{tpu_custom_call.1} parent=103 // pred_check
          %p817 = pneg %p116
        $region114: #{tpu_custom_call.1} parent=103 // pred_check_branch
          %819 = sbr.rel (%p817) target = $region116
        $region115: #{tpu_custom_call.1} parent=103 // pred_region
          %s820 = sand.u32 %s44, 1
          %s821 = scalar_lea.sflag [#allocation6], %s820
          %s822 = sand.u32 %s106, 1
          %s823 = smul.addr %s822, 8
          %s824 = scalar_lea.vmem [#allocation7], %s823
          %826 = vsyncadd %s821, 0
          %s827 = smul.addr %s44, 8
          %s828 = scalar_lea.hbm %s2, %s827
          %s830 = sshll.u32 %s828, 4
          %s831 = int_to_ptr.hbm [resolvable:$true] %s830
          %s832 = sshll.u32 %s824, 4
          %s833 = int_to_ptr.vmem [resolvable:$true] %s832
          %835 = dma.hbm_to_vmem [thread:$0]  %s831, 128, %s833, %s821
        $region116: #{tpu_custom_call.1} parent=103 // pred_fallthru
          _
      $region104: #{tpu_custom_call.1} parent=5 // pred_fallthru
        _
      %p836 = scmp.le.s32.totalorder 1, %s44
      %p837 = scmp.lt.s32.totalorder %s44, 3
      %p838 = pnand %p836, %p837
      %p839 = pneg %p838
      // Predicated region
      $region117: #{tpu_custom_call.1} parent=5 // pred_check
        _
      $region118: #{tpu_custom_call.1} parent=5 // pred_check_branch
        %841 = sbr.rel (%p838) target = $region120
      $region119: #{tpu_custom_call.1} parent=5 // pred_region
        %s842 = ssub.s32 %s44, 1
        %s843 = sand.u32 %s57, 1
        %s844 = scalar_lea.sflag [#allocation3], %s843
        %s845 = sand.u32 %s57, 1
        %s846 = smul.addr %s845, 8
        %s847 = scalar_lea.vmem [#allocation2], %s846
        // Predicated region
        $region121: #{tpu_custom_call.1} parent=119 // pred_check
          %p848 = pneg %p70
        $region122: #{tpu_custom_call.1} parent=119 // pred_check_branch
          %850 = sbr.rel (%p848) target = $region124
        $region123: #{tpu_custom_call.1} parent=119 // pred_region
          %852 = dma.done %s844, 128
        $region124: #{tpu_custom_call.1} parent=119 // pred_fallthru
          _
        %s853 = sand.u32 %s49, 1
        %s854 = scalar_lea.sflag [#allocation6], %s853
        %s855 = sand.u32 %s83, 1
        %s856 = smul.addr %s855, 8
        %s857 = scalar_lea.vmem [#allocation5], %s856
        // Predicated region
        $region125: #{tpu_custom_call.1} parent=119 // pred_check
          %p858 = pneg %p96
        $region126: #{tpu_custom_call.1} parent=119 // pred_check_branch
          %860 = sbr.rel (%p858) target = $region128
        $region127: #{tpu_custom_call.1} parent=119 // pred_region
          %862 = dma.done %s854, 128
        $region128: #{tpu_custom_call.1} parent=119 // pred_fallthru
          _
        %s863 = sand.u32 %s49, 1
        %s864 = scalar_lea.sflag [#allocation6], %s863
        %s865 = sand.u32 %s109, 1
        %s866 = smul.addr %s865, 8
        %s867 = scalar_lea.vmem [#allocation7], %s866
        // Predicated region
        $region129: #{tpu_custom_call.1} parent=119 // pred_check
          %p868 = pneg %p122
        $region130: #{tpu_custom_call.1} parent=119 // pred_check_branch
          %870 = sbr.rel (%p868) target = $region132
        $region131: #{tpu_custom_call.1} parent=119 // pred_region
          %872 = dma.done %s864, 128
        $region132: #{tpu_custom_call.1} parent=119 // pred_fallthru
          _
        // Predicated region
        $region133: #{tpu_custom_call.1} parent=119 // pred_check
          %p873 = pneg %p143
        $region134: #{tpu_custom_call.1} parent=119 // pred_check_branch
          %875 = sbr.rel (%p873) target = $region136
        $region135: #{tpu_custom_call.1} parent=119 // pred_region
          %877 = dma.done [#allocation9], 128
        $region136: #{tpu_custom_call.1} parent=119 // pred_fallthru
          _
        // Predicated region
        $region137: #{tpu_custom_call.1} parent=119 // pred_check
          %p878 = pneg %p164
        $region138: #{tpu_custom_call.1} parent=119 // pred_check_branch
          %880 = sbr.rel (%p878) target = $region140
        $region139: #{tpu_custom_call.1} parent=119 // pred_region
          %882 = dma.done [#allocation9], 128
        $region140: #{tpu_custom_call.1} parent=119 // pred_fallthru
          _
        // Predicated region
        $region141: #{tpu_custom_call.1} parent=119 // pred_check
          %p883 = pneg %p248
        $region142: #{tpu_custom_call.1} parent=119 // pred_check_branch
          %885 = sbr.rel (%p883) target = $region144
        $region143: #{tpu_custom_call.1} parent=119 // pred_region
          %887 = dma.done [#allocation12], 512
        $region144: #{tpu_custom_call.1} parent=119 // pred_fallthru
          _
        // Predicated region
        $region145: #{tpu_custom_call.1} parent=119 // pred_check
          %p888 = pneg %p332
        $region146: #{tpu_custom_call.1} parent=119 // pred_check_branch
          %890 = sbr.rel (%p888) target = $region148
        $region147: #{tpu_custom_call.1} parent=119 // pred_region
          %892 = dma.done [#allocation12], 512
        $region148: #{tpu_custom_call.1} parent=119 // pred_fallthru
          _
        // Predicated region
        $region149: #{tpu_custom_call.1} parent=119 // pred_check
          %p893 = pneg %p353
        $region150: #{tpu_custom_call.1} parent=119 // pred_check_branch
          %895 = sbr.rel (%p893) target = $region152
        $region151: #{tpu_custom_call.1} parent=119 // pred_region
          %897 = dma.done [#allocation15], 512
        $region152: #{tpu_custom_call.1} parent=119 // pred_fallthru
          _
        // Predicated region
        $region153: #{tpu_custom_call.1} parent=119 // pred_check
          %p898 = pneg %p374
        $region154: #{tpu_custom_call.1} parent=119 // pred_check_branch
          %900 = sbr.rel (%p898) target = $region156
        $region155: #{tpu_custom_call.1} parent=119 // pred_region
          %902 = dma.done [#allocation15], 512
        $region156: #{tpu_custom_call.1} parent=119 // pred_fallthru
          _
        // Predicated region
        $region157: #{tpu_custom_call.1} parent=119 // pred_check
          %p903 = pneg %p395
        $region158: #{tpu_custom_call.1} parent=119 // pred_check_branch
          %905 = sbr.rel (%p903) target = $region160
        $region159: #{tpu_custom_call.1} parent=119 // pred_region
          %907 = dma.done [#allocation18], 512
        $region160: #{tpu_custom_call.1} parent=119 // pred_fallthru
          _
        // Predicated region
        $region161: #{tpu_custom_call.1} parent=119 // pred_check
          %p908 = pneg %p479
        $region162: #{tpu_custom_call.1} parent=119 // pred_check_branch
          %910 = sbr.rel (%p908) target = $region164
        $region163: #{tpu_custom_call.1} parent=119 // pred_region
          %912 = dma.done [#allocation18], 512
        $region164: #{tpu_custom_call.1} parent=119 // pred_fallthru
          _
        %s913 = sand.u32 %s57, 1
        %s914 = scalar_lea.sflag [#allocation3], %s913
        %s915 = sand.u32 %s57, 1
        %s916 = smul.addr %s915, 8
        %s917 = scalar_lea.vmem [#allocation2], %s916
        %p918 = pneg %p70
        %p919 = pneg %p67
        %s920 = sand.u32 %s49, 1
        %s921 = scalar_lea.sflag [#allocation6], %s920
        %s922 = sand.u32 %s83, 1
        %s923 = smul.addr %s922, 8
        %s924 = scalar_lea.vmem [#allocation5], %s923
        %p925 = pneg %p96
        %p926 = pneg %p93
        %s927 = sand.u32 %s49, 1
        %s928 = scalar_lea.sflag [#allocation6], %s927
        %s929 = sand.u32 %s109, 1
        %s930 = smul.addr %s929, 8
        %s931 = scalar_lea.vmem [#allocation7], %s930
        %p932 = pneg %p122
        %p933 = pneg %p119
        %p934 = pneg %p143
        %p935 = pneg %p140
        %p936 = pneg %p164
        %p937 = pneg %p161
        %p938 = pneg %p185
        %p939 = pneg %p182
        %p940 = pneg %p206
        %p941 = pneg %p203
        %p942 = pneg %p227
        %p943 = pneg %p224
        %p944 = pneg %p248
        %p945 = pneg %p245
        %p946 = pneg %p269
        %p947 = pneg %p266
        %p948 = pneg %p290
        %p949 = pneg %p287
        %p950 = pneg %p311
        %p951 = pneg %p308
        %p952 = pneg %p332
        %p953 = pneg %p329
        %p954 = pneg %p353
        %p955 = pneg %p350
        %p956 = pneg %p374
        %p957 = pneg %p371
        %p958 = pneg %p395
        %p959 = pneg %p392
        %p960 = pneg %p416
        %p961 = pneg %p413
        %p962 = pneg %p437
        %p963 = pneg %p434
        %p964 = pneg %p458
        %p965 = pneg %p455
        %p966 = pneg %p479
        %p967 = pneg %p476
        %p968 = pneg %p500
        %p969 = pneg %p497
        %p970 = pneg %p521
        %p971 = pneg %p518
        %p972 = pneg %p542
        %p973 = pneg %p539
        %p974 = pneg %p563
        %p975 = pneg %p560
        %p976 = pneg %p584
        %p977 = pneg %p581
        %p978 = pneg %p610
        %p979 = pneg %p607
        %s980 = sand.u32 %s597, 1
        %s981 = scalar_lea.sflag [#allocation4], %s980
        %s982 = sand.u32 %s597, 1
        %s983 = smul.addr %s982, 8
        %s984 = scalar_lea.vmem [#allocation20], %s983
        %v985 = vld [vmem:[%s847] sm:$0xff]
        %v986 = vld [vmem:[%s857] sm:$0xff]
        %v987 = vld [vmem:[%s867] sm:$0xff]
        %v988 = vld [vmem:[#allocation8] sm:$0xff]
        %v989 = vld [vmem:[%s5] sm:$0xff]
        %v990 = vld [vmem:[%s5 + $0x8] sm:$0xff]
        %v991 = vld [vmem:[%s5 + $0x10] sm:$0xff]
        %v992 = vld [vmem:[%s5 + $0x18] sm:$0xff]
        %vm993 = vcmask 261120
        %v995 = vsel %vm993, %v985, 0
        %997 = vmatpush.msra.mxu0 0.0
        %998 = vmatpush.msra.mxu0 0.0
        %999 = vmatpush.msra.mxu0 0.0
        %1000 = vmatpush.msra.mxu0 0.0
        %1001 = vmatpush.msra.mxu0 0.0
        %1002 = vmatpush.msra.mxu0 0.0
        %1003 = vmatpush.msra.mxu0 0.0
        %1004 = vmatpush.msra.mxu0 0.0
        %1005 = vmatpush.msra.mxu0 0.0
        %1006 = vmatpush.msra.mxu0 0.0
        %1007 = vmatpush.msra.mxu0 0.0
        %1008 = vmatpush.msra.mxu0 0.0
        %1009 = vmatpush.msra.mxu0 %v992
        %1010 = vmatpush.msra.mxu0 %v991
        %1011 = vmatpush.msra.mxu0 %v990
        %1012 = vmatpush.msra.mxu0 %v989
        %1013 = vmatmul.f32.gmra.mxu0 %v995
        %v1014 = vpop.f32.mrf.mxu0
        %v1015 = vadd.f32 0.0, %v1014
        %1016 = vdwg.mxu0
        %v1017 = vld [vmem:[%s6] sm:$0xff]
        %v1018 = vld [vmem:[%s6 + $0x8] sm:$0xff]
        %v1019 = vld [vmem:[%s6 + $0x10] sm:$0xff]
        %v1020 = vld [vmem:[%s6 + $0x18] sm:$0xff]
        %1021 = vmatpush.msra.mxu0 0.0
        %1022 = vmatpush.msra.mxu0 0.0
        %1023 = vmatpush.msra.mxu0 0.0
        %1024 = vmatpush.msra.mxu0 0.0
        %1025 = vmatpush.msra.mxu0 0.0
        %1026 = vmatpush.msra.mxu0 0.0
        %1027 = vmatpush.msra.mxu0 0.0
        %1028 = vmatpush.msra.mxu0 0.0
        %1029 = vmatpush.msra.mxu0 0.0
        %1030 = vmatpush.msra.mxu0 0.0
        %1031 = vmatpush.msra.mxu0 0.0
        %1032 = vmatpush.msra.mxu0 0.0
        %1033 = vmatpush.msra.mxu0 %v1020
        %1034 = vmatpush.msra.mxu0 %v1019
        %1035 = vmatpush.msra.mxu0 %v1018
        %1036 = vmatpush.msra.mxu0 %v1017
        %1037 = vmatmul.f32.gmra.mxu0 %v995
        %v1038 = vpop.f32.mrf.mxu0
        %v1039 = vadd.f32 0.0, %v1038
        %1040 = vdwg.mxu0
        %v1041 = vld [vmem:[%s7] sm:$0xff]
        %v1042 = vld [vmem:[%s7 + $0x8] sm:$0xff]
        %v1043 = vld [vmem:[%s7 + $0x10] sm:$0xff]
        %v1044 = vld [vmem:[%s7 + $0x18] sm:$0xff]
        %1045 = vmatpush.msra.mxu0 0.0
        %1046 = vmatpush.msra.mxu0 0.0
        %1047 = vmatpush.msra.mxu0 0.0
        %1048 = vmatpush.msra.mxu0 0.0
        %1049 = vmatpush.msra.mxu0 0.0
        %1050 = vmatpush.msra.mxu0 0.0
        %1051 = vmatpush.msra.mxu0 0.0
        %1052 = vmatpush.msra.mxu0 0.0
        %1053 = vmatpush.msra.mxu0 0.0
        %1054 = vmatpush.msra.mxu0 0.0
        %1055 = vmatpush.msra.mxu0 0.0
        %1056 = vmatpush.msra.mxu0 0.0
        %1057 = vmatpush.msra.mxu0 %v1044
        %1058 = vmatpush.msra.mxu0 %v1043
        %1059 = vmatpush.msra.mxu0 %v1042
        %1060 = vmatpush.msra.mxu0 %v1041
        %1061 = vmatmul.f32.gmra.mxu0 %v995
        %v1062 = vpop.f32.mrf.mxu0
        %v1063 = vadd.f32 0.0, %v1062
        %1064 = vdwg.mxu0
        %v1065 = vld [vmem:[#allocation11] sm:$0xff]
        %v1066 = vld [vmem:[#allocation11 + $0x8] sm:$0xff]
        %v1067 = vld [vmem:[#allocation11 + $0x10] sm:$0xff]
        %v1068 = vld [vmem:[#allocation11 + $0x18] sm:$0xff]
        %vm1069 = vcmask 64512
        %v1071 = vsel %vm1069, %v1015, 0
        %v1074 = vsel %vm1069, %v1039, 0
        %1076 = vmatpush.xpose.msra.mxu0 0.0
        %1077 = vmatpush.xpose.msra.mxu0 0.0
        %1078 = vmatpush.xpose.msra.mxu0 0.0
        %1079 = vmatpush.xpose.msra.mxu0 0.0
        %1080 = vmatpush.xpose.msra.mxu0 0.0
        %1081 = vmatpush.xpose.msra.mxu0 0.0
        %1082 = vmatpush.xpose.msra.mxu0 0.0
        %1083 = vmatpush.xpose.msra.mxu0 0.0
        %1084 = vmatpush.xpose.msra.mxu0 0.0
        %1085 = vmatpush.xpose.msra.mxu0 0.0
        %1086 = vmatpush.xpose.msra.mxu0 0.0
        %1087 = vmatpush.xpose.msra.mxu0 0.0
        %1088 = vmatpush.xpose.msra.mxu0 0.0
        %1089 = vmatpush.xpose.msra.mxu0 0.0
        %1090 = vmatpush.xpose.msra.mxu0 0.0
        %1091 = vmatpush.xpose.msra.mxu0 %v1074
        %1092 = vmatmul.f32.gmra.mxu0 %v1071
        %v1093 = vpop.f32.mrf.mxu0
        %v1094 = vadd.f32 %v988, %v1093
        %1095 = vdwg.mxu0
        %v1096 = vmul.f32 %v1094, 0.17677669
        %v1097 = vsel %vm1069, %v1096, -inf
        %1098 = vmax.xlane.f32.xlu0 %v1097
        %v1099 = vpop.xlane.xlu0 %1098
        %v1100 = vsub.f32 %v1096, %v1099
        %v1101 = vmul.f32 %v1100, 1.442695
        %v1102 = vpow.pop %v1101
        %v1103 = vsel %vm1069, %v1102, 0.0
        %1104 = vadd.xlane.f32.xlu0 %v1103
        %v1105 = vpop.xlane.xlu0 %1104
        %v1106 = vrcp.pop %v1105
        %v1107 = vmul.f32 %v1105, %v1106
        %v1108 = vsub.f32 1.0, %v1107
        %v1109 = vmul.f32 %v1106, %v1108
        %v1110 = vadd.f32 %v1106, %v1109
        %vm1111 = vweird.f32 %v1105
        %vm1112 = vweird.f32 %v1106
        %vm1113 = vmor %vm1111, %vm1112
        %v1114 = vsel %vm1113, %v1106, %v1110
        %v1115 = vand.u32 2147483647, %v1105
        %vm1116 = vcmp.eq.f32.partialorder %v1115, 8.507059e+37
        %v1117 = vand.u32 %v1105, 2147483648
        %v1118 = vor.u32 1.1754944e-38, %v1117
        %v1119 = vsel %vm1116, %v1118, %v1114
        %v1120 = vmul.f32 %v1102, %v1119
        %v1122 = vsel %vm1069, %v1120, 0
        %1124 = vmatpush.msra.mxu0 0.0
        %1125 = vmatpush.msra.mxu0 0.0
        %1126 = vmatpush.msra.mxu0 0.0
        %1127 = vmatpush.msra.mxu0 0.0
        %1128 = vmatpush.msra.mxu0 0.0
        %1129 = vmatpush.msra.mxu0 0.0
        %1130 = vmatpush.msra.mxu0 0.0
        %1131 = vmatpush.msra.mxu0 0.0
        %1132 = vmatpush.msra.mxu0 0.0
        %1133 = vmatpush.msra.mxu0 0.0
        %1134 = vmatpush.msra.mxu0 0.0
        %1135 = vmatpush.msra.mxu0 0.0
        %1136 = vmatpush.msra.mxu0 0.0
        %1137 = vmatpush.msra.mxu0 0.0
        %1138 = vmatpush.msra.mxu0 0.0
        %1139 = vmatpush.msra.mxu0 %v1063
        %1140 = vmatmul.f32.gmra.mxu0 %v1122
        %v1141 = vpop.f32.mrf.mxu0
        %v1142 = vadd.f32 0.0, %v1141
        %1143 = vdwg.mxu0
        %1144 = vrot.lane.b32.xlu0 %v1015, 120
        %v1145 = vpop.permute.xlu0 %1144
        %1146 = vrot.lane.b32.xlu0 %v1039, 120
        %v1147 = vpop.permute.xlu0 %1146
        %v1148 = vsel %vm1069, %v1145, 0
        %v1150 = vsel %vm1069, %v1147, 0
        %1152 = vmatpush.xpose.msra.mxu0 0.0
        %1153 = vmatpush.xpose.msra.mxu0 0.0
        %1154 = vmatpush.xpose.msra.mxu0 0.0
        %1155 = vmatpush.xpose.msra.mxu0 0.0
        %1156 = vmatpush.xpose.msra.mxu0 0.0
        %1157 = vmatpush.xpose.msra.mxu0 0.0
        %1158 = vmatpush.xpose.msra.mxu0 0.0
        %1159 = vmatpush.xpose.msra.mxu0 0.0
        %1160 = vmatpush.xpose.msra.mxu0 0.0
        %1161 = vmatpush.xpose.msra.mxu0 0.0
        %1162 = vmatpush.xpose.msra.mxu0 0.0
        %1163 = vmatpush.xpose.msra.mxu0 0.0
        %1164 = vmatpush.xpose.msra.mxu0 0.0
        %1165 = vmatpush.xpose.msra.mxu0 0.0
        %1166 = vmatpush.xpose.msra.mxu0 0.0
        %1167 = vmatpush.xpose.msra.mxu0 %v1150
        %1168 = vmatmul.f32.gmra.mxu0 %v1148
        %v1169 = vpop.f32.mrf.mxu0
        %v1170 = vadd.f32 %v988, %v1169
        %1171 = vdwg.mxu0
        %v1172 = vmul.f32 %v1170, 0.17677669
        %v1173 = vsel %vm1069, %v1172, -inf
        %1174 = vmax.xlane.f32.xlu0 %v1173
        %v1175 = vpop.xlane.xlu0 %1174
        %v1176 = vsub.f32 %v1172, %v1175
        %v1177 = vmul.f32 %v1176, 1.442695
        %v1178 = vpow.pop %v1177
        %v1179 = vsel %vm1069, %v1178, 0.0
        %1180 = vadd.xlane.f32.xlu0 %v1179
        %v1181 = vpop.xlane.xlu0 %1180
        %v1182 = vrcp.pop %v1181
        %v1183 = vmul.f32 %v1181, %v1182
        %v1184 = vsub.f32 1.0, %v1183
        %v1185 = vmul.f32 %v1182, %v1184
        %v1186 = vadd.f32 %v1182, %v1185
        %vm1187 = vweird.f32 %v1181
        %vm1188 = vweird.f32 %v1182
        %vm1189 = vmor %vm1187, %vm1188
        %v1190 = vsel %vm1189, %v1182, %v1186
        %v1191 = vand.u32 2147483647, %v1181
        %vm1192 = vcmp.eq.f32.partialorder %v1191, 8.507059e+37
        %v1193 = vand.u32 %v1181, 2147483648
        %v1194 = vor.u32 1.1754944e-38, %v1193
        %v1195 = vsel %vm1192, %v1194, %v1190
        %v1196 = vmul.f32 %v1178, %v1195
        %1198 = vrot.lane.b32.xlu0 %v1063, 120
        %v1199 = vpop.permute.xlu0 %1198
        %v1202 = vsel %vm1069, %v1196, 0
        %1204 = vmatpush.msra.mxu0 0.0
        %1205 = vmatpush.msra.mxu0 0.0
        %1206 = vmatpush.msra.mxu0 0.0
        %1207 = vmatpush.msra.mxu0 0.0
        %1208 = vmatpush.msra.mxu0 0.0
        %1209 = vmatpush.msra.mxu0 0.0
        %1210 = vmatpush.msra.mxu0 0.0
        %1211 = vmatpush.msra.mxu0 0.0
        %1212 = vmatpush.msra.mxu0 0.0
        %1213 = vmatpush.msra.mxu0 0.0
        %1214 = vmatpush.msra.mxu0 0.0
        %1215 = vmatpush.msra.mxu0 0.0
        %1216 = vmatpush.msra.mxu0 0.0
        %1217 = vmatpush.msra.mxu0 0.0
        %1218 = vmatpush.msra.mxu0 0.0
        %1219 = vmatpush.msra.mxu0 %v1199
        %1220 = vmatmul.f32.gmra.mxu0 %v1202
        %v1221 = vpop.f32.mrf.mxu0
        %v1222 = vadd.f32 0.0, %v1221
        %1223 = vdwg.mxu0
        %v1225 = vsel %vm1069, %v1222, 0
        %1227 = vmatpush.msra.mxu0 0.0
        %1228 = vmatpush.msra.mxu0 0.0
        %1229 = vmatpush.msra.mxu0 0.0
        %1230 = vmatpush.msra.mxu0 0.0
        %1231 = vmatpush.msra.mxu0 0.0
        %1232 = vmatpush.msra.mxu0 0.0
        %1233 = vmatpush.msra.mxu0 0.0
        %1234 = vmatpush.msra.mxu0 0.0
        %1235 = vmatpush.msra.mxu0 0.0
        %1236 = vmatpush.msra.mxu0 0.0
        %1237 = vmatpush.msra.mxu0 0.0
        %1238 = vmatpush.msra.mxu0 0.0
        %1239 = vmatpush.msra.mxu0 0.0
        %1240 = vmatpush.msra.mxu0 0.0
        %1241 = vmatpush.msra.mxu0 0.0
        %1242 = vmatpush.msra.mxu0 %v1066
        %1243 = vmatmul.f32.gmra.mxu0 %v1225
        %v1244 = vpop.f32.mrf.mxu0
        %v1245 = vadd.f32 0.0, %v1244
        %1246 = vdwg.mxu0
        %v1248 = vsel %vm1069, %v1142, 0
        %1250 = vmatpush.msra.mxu0 0.0
        %1251 = vmatpush.msra.mxu0 0.0
        %1252 = vmatpush.msra.mxu0 0.0
        %1253 = vmatpush.msra.mxu0 0.0
        %1254 = vmatpush.msra.mxu0 0.0
        %1255 = vmatpush.msra.mxu0 0.0
        %1256 = vmatpush.msra.mxu0 0.0
        %1257 = vmatpush.msra.mxu0 0.0
        %1258 = vmatpush.msra.mxu0 0.0
        %1259 = vmatpush.msra.mxu0 0.0
        %1260 = vmatpush.msra.mxu0 0.0
        %1261 = vmatpush.msra.mxu0 0.0
        %1262 = vmatpush.msra.mxu0 0.0
        %1263 = vmatpush.msra.mxu0 0.0
        %1264 = vmatpush.msra.mxu0 0.0
        %1265 = vmatpush.msra.mxu0 %v1065
        %1266 = vmatmul.f32.gmra.mxu0 %v1248
        %v1267 = vpop.f32.mrf.mxu0
        %v1268 = vadd.f32 %v1245, %v1267
        %1269 = vdwg.mxu0
        %1270 = vrot.lane.b32.xlu0 %v1015, 112
        %v1271 = vpop.permute.xlu0 %1270
        %1272 = vrot.lane.b32.xlu0 %v1039, 112
        %v1273 = vpop.permute.xlu0 %1272
        %v1274 = vsel %vm1069, %v1271, 0
        %v1276 = vsel %vm1069, %v1273, 0
        %1278 = vmatpush.xpose.msra.mxu0 0.0
        %1279 = vmatpush.xpose.msra.mxu0 0.0
        %1280 = vmatpush.xpose.msra.mxu0 0.0
        %1281 = vmatpush.xpose.msra.mxu0 0.0
        %1282 = vmatpush.xpose.msra.mxu0 0.0
        %1283 = vmatpush.xpose.msra.mxu0 0.0
        %1284 = vmatpush.xpose.msra.mxu0 0.0
        %1285 = vmatpush.xpose.msra.mxu0 0.0
        %1286 = vmatpush.xpose.msra.mxu0 0.0
        %1287 = vmatpush.xpose.msra.mxu0 0.0
        %1288 = vmatpush.xpose.msra.mxu0 0.0
        %1289 = vmatpush.xpose.msra.mxu0 0.0
        %1290 = vmatpush.xpose.msra.mxu0 0.0
        %1291 = vmatpush.xpose.msra.mxu0 0.0
        %1292 = vmatpush.xpose.msra.mxu0 0.0
        %1293 = vmatpush.xpose.msra.mxu0 %v1276
        %1294 = vmatmul.f32.gmra.mxu0 %v1274
        %v1295 = vpop.f32.mrf.mxu0
        %v1296 = vadd.f32 %v988, %v1295
        %1297 = vdwg.mxu0
        %v1298 = vmul.f32 %v1296, 0.17677669
        %v1299 = vsel %vm1069, %v1298, -inf
        %1300 = vmax.xlane.f32.xlu0 %v1299
        %v1301 = vpop.xlane.xlu0 %1300
        %v1302 = vsub.f32 %v1298, %v1301
        %v1303 = vmul.f32 %v1302, 1.442695
        %v1304 = vpow.pop %v1303
        %v1305 = vsel %vm1069, %v1304, 0.0
        %1306 = vadd.xlane.f32.xlu0 %v1305
        %v1307 = vpop.xlane.xlu0 %1306
        %v1308 = vrcp.pop %v1307
        %v1309 = vmul.f32 %v1307, %v1308
        %v1310 = vsub.f32 1.0, %v1309
        %v1311 = vmul.f32 %v1308, %v1310
        %v1312 = vadd.f32 %v1308, %v1311
        %vm1313 = vweird.f32 %v1307
        %vm1314 = vweird.f32 %v1308
        %vm1315 = vmor %vm1313, %vm1314
        %v1316 = vsel %vm1315, %v1308, %v1312
        %v1317 = vand.u32 2147483647, %v1307
        %vm1318 = vcmp.eq.f32.partialorder %v1317, 8.507059e+37
        %v1319 = vand.u32 %v1307, 2147483648
        %v1320 = vor.u32 1.1754944e-38, %v1319
        %v1321 = vsel %vm1318, %v1320, %v1316
        %v1322 = vmul.f32 %v1304, %v1321
        %1323 = vrot.lane.b32.xlu0 %v1063, 112
        %v1324 = vpop.permute.xlu0 %1323
        %v1327 = vsel %vm1069, %v1322, 0
        %1329 = vmatpush.msra.mxu0 0.0
        %1330 = vmatpush.msra.mxu0 0.0
        %1331 = vmatpush.msra.mxu0 0.0
        %1332 = vmatpush.msra.mxu0 0.0
        %1333 = vmatpush.msra.mxu0 0.0
        %1334 = vmatpush.msra.mxu0 0.0
        %1335 = vmatpush.msra.mxu0 0.0
        %1336 = vmatpush.msra.mxu0 0.0
        %1337 = vmatpush.msra.mxu0 0.0
        %1338 = vmatpush.msra.mxu0 0.0
        %1339 = vmatpush.msra.mxu0 0.0
        %1340 = vmatpush.msra.mxu0 0.0
        %1341 = vmatpush.msra.mxu0 0.0
        %1342 = vmatpush.msra.mxu0 0.0
        %1343 = vmatpush.msra.mxu0 0.0
        %1344 = vmatpush.msra.mxu0 %v1324
        %1345 = vmatmul.f32.gmra.mxu0 %v1327
        %v1346 = vpop.f32.mrf.mxu0
        %v1347 = vadd.f32 0.0, %v1346
        %1348 = vdwg.mxu0
        %v1350 = vsel %vm1069, %v1347, 0
        %1352 = vmatpush.msra.mxu0 0.0
        %1353 = vmatpush.msra.mxu0 0.0
        %1354 = vmatpush.msra.mxu0 0.0
        %1355 = vmatpush.msra.mxu0 0.0
        %1356 = vmatpush.msra.mxu0 0.0
        %1357 = vmatpush.msra.mxu0 0.0
        %1358 = vmatpush.msra.mxu0 0.0
        %1359 = vmatpush.msra.mxu0 0.0
        %1360 = vmatpush.msra.mxu0 0.0
        %1361 = vmatpush.msra.mxu0 0.0
        %1362 = vmatpush.msra.mxu0 0.0
        %1363 = vmatpush.msra.mxu0 0.0
        %1364 = vmatpush.msra.mxu0 0.0
        %1365 = vmatpush.msra.mxu0 0.0
        %1366 = vmatpush.msra.mxu0 0.0
        %1367 = vmatpush.msra.mxu0 %v1067
        %1368 = vmatmul.f32.gmra.mxu0 %v1350
        %v1369 = vpop.f32.mrf.mxu0
        %v1370 = vadd.f32 0.0, %v1369
        %1371 = vdwg.mxu0
        %v1372 = vadd.f32 %v1268, %v1370
        %1373 = vrot.lane.b32.xlu0 %v1015, 104
        %v1374 = vpop.permute.xlu0 %1373
        %1375 = vrot.lane.b32.xlu0 %v1039, 104
        %v1376 = vpop.permute.xlu0 %1375
        %v1377 = vsel %vm1069, %v1374, 0
        %v1379 = vsel %vm1069, %v1376, 0
        %1381 = vmatpush.xpose.msra.mxu0 0.0
        %1382 = vmatpush.xpose.msra.mxu0 0.0
        %1383 = vmatpush.xpose.msra.mxu0 0.0
        %1384 = vmatpush.xpose.msra.mxu0 0.0
        %1385 = vmatpush.xpose.msra.mxu0 0.0
        %1386 = vmatpush.xpose.msra.mxu0 0.0
        %1387 = vmatpush.xpose.msra.mxu0 0.0
        %1388 = vmatpush.xpose.msra.mxu0 0.0
        %1389 = vmatpush.xpose.msra.mxu0 0.0
        %1390 = vmatpush.xpose.msra.mxu0 0.0
        %1391 = vmatpush.xpose.msra.mxu0 0.0
        %1392 = vmatpush.xpose.msra.mxu0 0.0
        %1393 = vmatpush.xpose.msra.mxu0 0.0
        %1394 = vmatpush.xpose.msra.mxu0 0.0
        %1395 = vmatpush.xpose.msra.mxu0 0.0
        %1396 = vmatpush.xpose.msra.mxu0 %v1379
        %1397 = vmatmul.f32.gmra.mxu0 %v1377
        %v1398 = vpop.f32.mrf.mxu0
        %v1399 = vadd.f32 %v988, %v1398
        %1400 = vdwg.mxu0
        %v1401 = vmul.f32 %v1399, 0.17677669
        %v1402 = vsel %vm1069, %v1401, -inf
        %1403 = vmax.xlane.f32.xlu0 %v1402
        %v1404 = vpop.xlane.xlu0 %1403
        %v1405 = vsub.f32 %v1401, %v1404
        %v1406 = vmul.f32 %v1405, 1.442695
        %v1407 = vpow.pop %v1406
        %v1408 = vsel %vm1069, %v1407, 0.0
        %1409 = vadd.xlane.f32.xlu0 %v1408
        %v1410 = vpop.xlane.xlu0 %1409
        %v1411 = vrcp.pop %v1410
        %v1412 = vmul.f32 %v1410, %v1411
        %v1413 = vsub.f32 1.0, %v1412
        %v1414 = vmul.f32 %v1411, %v1413
        %v1415 = vadd.f32 %v1411, %v1414
        %vm1416 = vweird.f32 %v1410
        %vm1417 = vweird.f32 %v1411
        %vm1418 = vmor %vm1416, %vm1417
        %v1419 = vsel %vm1418, %v1411, %v1415
        %v1420 = vand.u32 2147483647, %v1410
        %vm1421 = vcmp.eq.f32.partialorder %v1420, 8.507059e+37
        %v1422 = vand.u32 %v1410, 2147483648
        %v1423 = vor.u32 1.1754944e-38, %v1422
        %v1424 = vsel %vm1421, %v1423, %v1419
        %v1425 = vmul.f32 %v1407, %v1424
        %1426 = vrot.lane.b32.xlu0 %v1063, 104
        %v1427 = vpop.permute.xlu0 %1426
        %v1430 = vsel %vm1069, %v1425, 0
        %1432 = vmatpush.msra.mxu0 0.0
        %1433 = vmatpush.msra.mxu0 0.0
        %1434 = vmatpush.msra.mxu0 0.0
        %1435 = vmatpush.msra.mxu0 0.0
        %1436 = vmatpush.msra.mxu0 0.0
        %1437 = vmatpush.msra.mxu0 0.0
        %1438 = vmatpush.msra.mxu0 0.0
        %1439 = vmatpush.msra.mxu0 0.0
        %1440 = vmatpush.msra.mxu0 0.0
        %1441 = vmatpush.msra.mxu0 0.0
        %1442 = vmatpush.msra.mxu0 0.0
        %1443 = vmatpush.msra.mxu0 0.0
        %1444 = vmatpush.msra.mxu0 0.0
        %1445 = vmatpush.msra.mxu0 0.0
        %1446 = vmatpush.msra.mxu0 0.0
        %1447 = vmatpush.msra.mxu0 %v1427
        %1448 = vmatmul.f32.gmra.mxu0 %v1430
        %v1449 = vpop.f32.mrf.mxu0
        %v1450 = vadd.f32 0.0, %v1449
        %1451 = vdwg.mxu0
        %v1453 = vsel %vm1069, %v1450, 0
        %1455 = vmatpush.msra.mxu0 0.0
        %1456 = vmatpush.msra.mxu0 0.0
        %1457 = vmatpush.msra.mxu0 0.0
        %1458 = vmatpush.msra.mxu0 0.0
        %1459 = vmatpush.msra.mxu0 0.0
        %1460 = vmatpush.msra.mxu0 0.0
        %1461 = vmatpush.msra.mxu0 0.0
        %1462 = vmatpush.msra.mxu0 0.0
        %1463 = vmatpush.msra.mxu0 0.0
        %1464 = vmatpush.msra.mxu0 0.0
        %1465 = vmatpush.msra.mxu0 0.0
        %1466 = vmatpush.msra.mxu0 0.0
        %1467 = vmatpush.msra.mxu0 0.0
        %1468 = vmatpush.msra.mxu0 0.0
        %1469 = vmatpush.msra.mxu0 0.0
        %1470 = vmatpush.msra.mxu0 %v1068
        %1471 = vmatmul.f32.gmra.mxu0 %v1453
        %v1472 = vpop.f32.mrf.mxu0
        %v1473 = vadd.f32 0.0, %v1472
        %1474 = vdwg.mxu0
        %v1475 = vadd.f32 %v1372, %v1473
        %v1476 = vld [vmem:[%s9] sm:$0x1]
        %v1478 = vperm.slane %v1476, 0
        %v1480 = vadd.f32 %v1475, %v1478
        %v1481 = vadd.f32 %v1480, %v985
        %v1482 = vld [vmem:[%s10] sm:$0x1]
        %v1483 = vld [vmem:[%s11] sm:$0x1]
        %v1484 = vsel %vm993, %v1481, 0.0
        %1485 = vadd.xlane.f32.xlu0 %v1484
        %v1486 = vpop.xlane.xlu0 %1485
        %v1487 = vrcp.pop 32.0
        %v1488 = vmul.f32 32.0, %v1487
        %v1489 = vsub.f32 1.0, %v1488
        %v1490 = vmul.f32 %v1487, %v1489
        %v1491 = vadd.f32 %v1487, %v1490
        %vm1492 = vweird.f32 %v1487
        %v1493 = vsel %vm1492, %v1487, %v1491
        %v1494 = vmul.f32 %v1486, %v1493
        %v1495 = vsub.f32 %v1481, %v1494
        %v1496 = vmul.f32 %v1495, %v1495
        %v1497 = vsel %vm993, %v1496, 0.0
        %1498 = vadd.xlane.f32.xlu0 %v1497
        %v1499 = vpop.xlane.xlu0 %1498
        %v1500 = vmul.f32 %v1499, %v1493
        %v1501 = vadd.f32 %v1500, 1e-05
        %v1502 = vrsqrt.pop %v1501
        %v1503 = vmul.f32 %v1502, %v1501
        %v1504 = vmul.f32 %v1503, %v1502
        %v1505 = vmul.f32 0.5, %v1504
        %v1506 = vsub.f32 1.5, %v1505
        %v1507 = vmul.f32 %v1502, %v1506
        %vm1508 = vweird.f32 %v1501
        %vm1509 = vweird.f32 %v1502
        %vm1510 = vmor %vm1508, %vm1509
        %v1511 = vsel %vm1510, %v1502, %v1507
        %v1512 = vmul.f32 %v1495, %v1511
        %v1514 = vperm.slane %v1482, 0
        %v1516 = vmul.f32 %v1512, %v1514
        %v1518 = vperm.slane %v1483, 0
        %v1520 = vadd.f32 %v1516, %v1518
        %v1521 = vld [vmem:[#allocation10] sm:$0xff]
        %v1522 = vld [vmem:[#allocation13] sm:$0xff]
        %v1523 = vld [vmem:[#allocation13 + $0x8] sm:$0xff]
        %v1524 = vld [vmem:[#allocation13 + $0x10] sm:$0xff]
        %v1525 = vld [vmem:[#allocation13 + $0x18] sm:$0xff]
        %v1527 = vsel %vm993, %v1520, 0
        %1529 = vmatpush.msra.mxu0 0.0
        %1530 = vmatpush.msra.mxu0 0.0
        %1531 = vmatpush.msra.mxu0 0.0
        %1532 = vmatpush.msra.mxu0 0.0
        %1533 = vmatpush.msra.mxu0 0.0
        %1534 = vmatpush.msra.mxu0 0.0
        %1535 = vmatpush.msra.mxu0 0.0
        %1536 = vmatpush.msra.mxu0 0.0
        %1537 = vmatpush.msra.mxu0 0.0
        %1538 = vmatpush.msra.mxu0 0.0
        %1539 = vmatpush.msra.mxu0 0.0
        %1540 = vmatpush.msra.mxu0 0.0
        %1541 = vmatpush.msra.mxu0 %v1525
        %1542 = vmatpush.msra.mxu0 %v1524
        %1543 = vmatpush.msra.mxu0 %v1523
        %1544 = vmatpush.msra.mxu0 %v1522
        %1545 = vmatmul.f32.gmra.mxu0 %v1527
        %v1546 = vpop.f32.mrf.mxu0
        %v1547 = vadd.f32 0.0, %v1546
        %1548 = vdwg.mxu0
        %v1549 = vld [vmem:[#allocation14] sm:$0xff]
        %v1550 = vld [vmem:[#allocation14 + $0x8] sm:$0xff]
        %v1551 = vld [vmem:[#allocation14 + $0x10] sm:$0xff]
        %v1552 = vld [vmem:[#allocation14 + $0x18] sm:$0xff]
        %v1554 = vsel %vm993, %v987, 0
        %1556 = vmatpush.msra.mxu0 0.0
        %1557 = vmatpush.msra.mxu0 0.0
        %1558 = vmatpush.msra.mxu0 0.0
        %1559 = vmatpush.msra.mxu0 0.0
        %1560 = vmatpush.msra.mxu0 0.0
        %1561 = vmatpush.msra.mxu0 0.0
        %1562 = vmatpush.msra.mxu0 0.0
        %1563 = vmatpush.msra.mxu0 0.0
        %1564 = vmatpush.msra.mxu0 0.0
        %1565 = vmatpush.msra.mxu0 0.0
        %1566 = vmatpush.msra.mxu0 0.0
        %1567 = vmatpush.msra.mxu0 0.0
        %1568 = vmatpush.msra.mxu0 %v1552
        %1569 = vmatpush.msra.mxu0 %v1551
        %1570 = vmatpush.msra.mxu0 %v1550
        %1571 = vmatpush.msra.mxu0 %v1549
        %1572 = vmatmul.f32.gmra.mxu0 %v1554
        %v1573 = vpop.f32.mrf.mxu0
        %v1574 = vadd.f32 0.0, %v1573
        %1575 = vdwg.mxu0
        %v1576 = vld [vmem:[#allocation16] sm:$0xff]
        %v1577 = vld [vmem:[#allocation16 + $0x8] sm:$0xff]
        %v1578 = vld [vmem:[#allocation16 + $0x10] sm:$0xff]
        %v1579 = vld [vmem:[#allocation16 + $0x18] sm:$0xff]
        %v1581 = vsel %vm993, %v986, 0
        %1583 = vmatpush.msra.mxu0 0.0
        %1584 = vmatpush.msra.mxu0 0.0
        %1585 = vmatpush.msra.mxu0 0.0
        %1586 = vmatpush.msra.mxu0 0.0
        %1587 = vmatpush.msra.mxu0 0.0
        %1588 = vmatpush.msra.mxu0 0.0
        %1589 = vmatpush.msra.mxu0 0.0
        %1590 = vmatpush.msra.mxu0 0.0
        %1591 = vmatpush.msra.mxu0 0.0
        %1592 = vmatpush.msra.mxu0 0.0
        %1593 = vmatpush.msra.mxu0 0.0
        %1594 = vmatpush.msra.mxu0 0.0
        %1595 = vmatpush.msra.mxu0 %v1579
        %1596 = vmatpush.msra.mxu0 %v1578
        %1597 = vmatpush.msra.mxu0 %v1577
        %1598 = vmatpush.msra.mxu0 %v1576
        %1599 = vmatmul.f32.gmra.mxu0 %v1581
        %v1600 = vpop.f32.mrf.mxu0
        %v1601 = vadd.f32 0.0, %v1600
        %1602 = vdwg.mxu0
        %v1603 = vld [vmem:[#allocation17] sm:$0xff]
        %v1604 = vld [vmem:[#allocation17 + $0x8] sm:$0xff]
        %v1605 = vld [vmem:[#allocation17 + $0x10] sm:$0xff]
        %v1606 = vld [vmem:[#allocation17 + $0x18] sm:$0xff]
        %v1608 = vsel %vm1069, %v1547, 0
        %v1611 = vsel %vm1069, %v1574, 0
        %1613 = vmatpush.xpose.msra.mxu0 0.0
        %1614 = vmatpush.xpose.msra.mxu0 0.0
        %1615 = vmatpush.xpose.msra.mxu0 0.0
        %1616 = vmatpush.xpose.msra.mxu0 0.0
        %1617 = vmatpush.xpose.msra.mxu0 0.0
        %1618 = vmatpush.xpose.msra.mxu0 0.0
        %1619 = vmatpush.xpose.msra.mxu0 0.0
        %1620 = vmatpush.xpose.msra.mxu0 0.0
        %1621 = vmatpush.xpose.msra.mxu0 0.0
        %1622 = vmatpush.xpose.msra.mxu0 0.0
        %1623 = vmatpush.xpose.msra.mxu0 0.0
        %1624 = vmatpush.xpose.msra.mxu0 0.0
        %1625 = vmatpush.xpose.msra.mxu0 0.0
        %1626 = vmatpush.xpose.msra.mxu0 0.0
        %1627 = vmatpush.xpose.msra.mxu0 0.0
        %1628 = vmatpush.xpose.msra.mxu0 %v1611
        %1629 = vmatmul.f32.gmra.mxu0 %v1608
        %v1630 = vpop.f32.mrf.mxu0
        %v1631 = vadd.f32 %v1521, %v1630
        %1632 = vdwg.mxu0
        %v1633 = vmul.f32 %v1631, 0.17677669
        %v1634 = vsel %vm1069, %v1633, -inf
        %1635 = vmax.xlane.f32.xlu0 %v1634
        %v1636 = vpop.xlane.xlu0 %1635
        %v1637 = vsub.f32 %v1633, %v1636
        %v1638 = vmul.f32 %v1637, 1.442695
        %v1639 = vpow.pop %v1638
        %v1640 = vsel %vm1069, %v1639, 0.0
        %1641 = vadd.xlane.f32.xlu0 %v1640
        %v1642 = vpop.xlane.xlu0 %1641
        %v1643 = vrcp.pop %v1642
        %v1644 = vmul.f32 %v1642, %v1643
        %v1645 = vsub.f32 1.0, %v1644
        %v1646 = vmul.f32 %v1643, %v1645
        %v1647 = vadd.f32 %v1643, %v1646
        %vm1648 = vweird.f32 %v1642
        %vm1649 = vweird.f32 %v1643
        %vm1650 = vmor %vm1648, %vm1649
        %v1651 = vsel %vm1650, %v1643, %v1647
        %v1652 = vand.u32 2147483647, %v1642
        %vm1653 = vcmp.eq.f32.partialorder %v1652, 8.507059e+37
        %v1654 = vand.u32 %v1642, 2147483648
        %v1655 = vor.u32 1.1754944e-38, %v1654
        %v1656 = vsel %vm1653, %v1655, %v1651
        %v1657 = vmul.f32 %v1639, %v1656
        %v1659 = vsel %vm1069, %v1657, 0
        %1661 = vmatpush.msra.mxu0 0.0
        %1662 = vmatpush.msra.mxu0 0.0
        %1663 = vmatpush.msra.mxu0 0.0
        %1664 = vmatpush.msra.mxu0 0.0
        %1665 = vmatpush.msra.mxu0 0.0
        %1666 = vmatpush.msra.mxu0 0.0
        %1667 = vmatpush.msra.mxu0 0.0
        %1668 = vmatpush.msra.mxu0 0.0
        %1669 = vmatpush.msra.mxu0 0.0
        %1670 = vmatpush.msra.mxu0 0.0
        %1671 = vmatpush.msra.mxu0 0.0
        %1672 = vmatpush.msra.mxu0 0.0
        %1673 = vmatpush.msra.mxu0 0.0
        %1674 = vmatpush.msra.mxu0 0.0
        %1675 = vmatpush.msra.mxu0 0.0
        %1676 = vmatpush.msra.mxu0 %v1601
        %1677 = vmatmul.f32.gmra.mxu0 %v1659
        %v1678 = vpop.f32.mrf.mxu0
        %v1679 = vadd.f32 0.0, %v1678
        %1680 = vdwg.mxu0
        %1681 = vrot.lane.b32.xlu0 %v1547, 120
        %v1682 = vpop.permute.xlu0 %1681
        %1683 = vrot.lane.b32.xlu0 %v1574, 120
        %v1684 = vpop.permute.xlu0 %1683
        %v1685 = vsel %vm1069, %v1682, 0
        %v1687 = vsel %vm1069, %v1684, 0
        %1689 = vmatpush.xpose.msra.mxu0 0.0
        %1690 = vmatpush.xpose.msra.mxu0 0.0
        %1691 = vmatpush.xpose.msra.mxu0 0.0
        %1692 = vmatpush.xpose.msra.mxu0 0.0
        %1693 = vmatpush.xpose.msra.mxu0 0.0
        %1694 = vmatpush.xpose.msra.mxu0 0.0
        %1695 = vmatpush.xpose.msra.mxu0 0.0
        %1696 = vmatpush.xpose.msra.mxu0 0.0
        %1697 = vmatpush.xpose.msra.mxu0 0.0
        %1698 = vmatpush.xpose.msra.mxu0 0.0
        %1699 = vmatpush.xpose.msra.mxu0 0.0
        %1700 = vmatpush.xpose.msra.mxu0 0.0
        %1701 = vmatpush.xpose.msra.mxu0 0.0
        %1702 = vmatpush.xpose.msra.mxu0 0.0
        %1703 = vmatpush.xpose.msra.mxu0 0.0
        %1704 = vmatpush.xpose.msra.mxu0 %v1687
        %1705 = vmatmul.f32.gmra.mxu0 %v1685
        %v1706 = vpop.f32.mrf.mxu0
        %v1707 = vadd.f32 %v1521, %v1706
        %1708 = vdwg.mxu0
        %v1709 = vmul.f32 %v1707, 0.17677669
        %v1710 = vsel %vm1069, %v1709, -inf
        %1711 = vmax.xlane.f32.xlu0 %v1710
        %v1712 = vpop.xlane.xlu0 %1711
        %v1713 = vsub.f32 %v1709, %v1712
        %v1714 = vmul.f32 %v1713, 1.442695
        %v1715 = vpow.pop %v1714
        %v1716 = vsel %vm1069, %v1715, 0.0
        %1717 = vadd.xlane.f32.xlu0 %v1716
        %v1718 = vpop.xlane.xlu0 %1717
        %v1719 = vrcp.pop %v1718
        %v1720 = vmul.f32 %v1718, %v1719
        %v1721 = vsub.f32 1.0, %v1720
        %v1722 = vmul.f32 %v1719, %v1721
        %v1723 = vadd.f32 %v1719, %v1722
        %vm1724 = vweird.f32 %v1718
        %vm1725 = vweird.f32 %v1719
        %vm1726 = vmor %vm1724, %vm1725
        %v1727 = vsel %vm1726, %v1719, %v1723
        %v1728 = vand.u32 2147483647, %v1718
        %vm1729 = vcmp.eq.f32.partialorder %v1728, 8.507059e+37
        %v1730 = vand.u32 %v1718, 2147483648
        %v1731 = vor.u32 1.1754944e-38, %v1730
        %v1732 = vsel %vm1729, %v1731, %v1727
        %v1733 = vmul.f32 %v1715, %v1732
        %1735 = vrot.lane.b32.xlu0 %v1601, 120
        %v1736 = vpop.permute.xlu0 %1735
        %v1739 = vsel %vm1069, %v1733, 0
        %1741 = vmatpush.msra.mxu0 0.0
        %1742 = vmatpush.msra.mxu0 0.0
        %1743 = vmatpush.msra.mxu0 0.0
        %1744 = vmatpush.msra.mxu0 0.0
        %1745 = vmatpush.msra.mxu0 0.0
        %1746 = vmatpush.msra.mxu0 0.0
        %1747 = vmatpush.msra.mxu0 0.0
        %1748 = vmatpush.msra.mxu0 0.0
        %1749 = vmatpush.msra.mxu0 0.0
        %1750 = vmatpush.msra.mxu0 0.0
        %1751 = vmatpush.msra.mxu0 0.0
        %1752 = vmatpush.msra.mxu0 0.0
        %1753 = vmatpush.msra.mxu0 0.0
        %1754 = vmatpush.msra.mxu0 0.0
        %1755 = vmatpush.msra.mxu0 0.0
        %1756 = vmatpush.msra.mxu0 %v1736
        %1757 = vmatmul.f32.gmra.mxu0 %v1739
        %v1758 = vpop.f32.mrf.mxu0
        %v1759 = vadd.f32 0.0, %v1758
        %1760 = vdwg.mxu0
        %v1762 = vsel %vm1069, %v1759, 0
        %1764 = vmatpush.msra.mxu0 0.0
        %1765 = vmatpush.msra.mxu0 0.0
        %1766 = vmatpush.msra.mxu0 0.0
        %1767 = vmatpush.msra.mxu0 0.0
        %1768 = vmatpush.msra.mxu0 0.0
        %1769 = vmatpush.msra.mxu0 0.0
        %1770 = vmatpush.msra.mxu0 0.0
        %1771 = vmatpush.msra.mxu0 0.0
        %1772 = vmatpush.msra.mxu0 0.0
        %1773 = vmatpush.msra.mxu0 0.0
        %1774 = vmatpush.msra.mxu0 0.0
        %1775 = vmatpush.msra.mxu0 0.0
        %1776 = vmatpush.msra.mxu0 0.0
        %1777 = vmatpush.msra.mxu0 0.0
        %1778 = vmatpush.msra.mxu0 0.0
        %1779 = vmatpush.msra.mxu0 %v1604
        %1780 = vmatmul.f32.gmra.mxu0 %v1762
        %v1781 = vpop.f32.mrf.mxu0
        %v1782 = vadd.f32 0.0, %v1781
        %1783 = vdwg.mxu0
        %v1785 = vsel %vm1069, %v1679, 0
        %1787 = vmatpush.msra.mxu0 0.0
        %1788 = vmatpush.msra.mxu0 0.0
        %1789 = vmatpush.msra.mxu0 0.0
        %1790 = vmatpush.msra.mxu0 0.0
        %1791 = vmatpush.msra.mxu0 0.0
        %1792 = vmatpush.msra.mxu0 0.0
        %1793 = vmatpush.msra.mxu0 0.0
        %1794 = vmatpush.msra.mxu0 0.0
        %1795 = vmatpush.msra.mxu0 0.0
        %1796 = vmatpush.msra.mxu0 0.0
        %1797 = vmatpush.msra.mxu0 0.0
        %1798 = vmatpush.msra.mxu0 0.0
        %1799 = vmatpush.msra.mxu0 0.0
        %1800 = vmatpush.msra.mxu0 0.0
        %1801 = vmatpush.msra.mxu0 0.0
        %1802 = vmatpush.msra.mxu0 %v1603
        %1803 = vmatmul.f32.gmra.mxu0 %v1785
        %v1804 = vpop.f32.mrf.mxu0
        %v1805 = vadd.f32 %v1782, %v1804
        %1806 = vdwg.mxu0
        %1807 = vrot.lane.b32.xlu0 %v1547, 112
        %v1808 = vpop.permute.xlu0 %1807
        %1809 = vrot.lane.b32.xlu0 %v1574, 112
        %v1810 = vpop.permute.xlu0 %1809
        %v1811 = vsel %vm1069, %v1808, 0
        %v1813 = vsel %vm1069, %v1810, 0
        %1815 = vmatpush.xpose.msra.mxu0 0.0
        %1816 = vmatpush.xpose.msra.mxu0 0.0
        %1817 = vmatpush.xpose.msra.mxu0 0.0
        %1818 = vmatpush.xpose.msra.mxu0 0.0
        %1819 = vmatpush.xpose.msra.mxu0 0.0
        %1820 = vmatpush.xpose.msra.mxu0 0.0
        %1821 = vmatpush.xpose.msra.mxu0 0.0
        %1822 = vmatpush.xpose.msra.mxu0 0.0
        %1823 = vmatpush.xpose.msra.mxu0 0.0
        %1824 = vmatpush.xpose.msra.mxu0 0.0
        %1825 = vmatpush.xpose.msra.mxu0 0.0
        %1826 = vmatpush.xpose.msra.mxu0 0.0
        %1827 = vmatpush.xpose.msra.mxu0 0.0
        %1828 = vmatpush.xpose.msra.mxu0 0.0
        %1829 = vmatpush.xpose.msra.mxu0 0.0
        %1830 = vmatpush.xpose.msra.mxu0 %v1813
        %1831 = vmatmul.f32.gmra.mxu0 %v1811
        %v1832 = vpop.f32.mrf.mxu0
        %v1833 = vadd.f32 %v1521, %v1832
        %1834 = vdwg.mxu0
        %v1835 = vmul.f32 %v1833, 0.17677669
        %v1836 = vsel %vm1069, %v1835, -inf
        %1837 = vmax.xlane.f32.xlu0 %v1836
        %v1838 = vpop.xlane.xlu0 %1837
        %v1839 = vsub.f32 %v1835, %v1838
        %v1840 = vmul.f32 %v1839, 1.442695
        %v1841 = vpow.pop %v1840
        %v1842 = vsel %vm1069, %v1841, 0.0
        %1843 = vadd.xlane.f32.xlu0 %v1842
        %v1844 = vpop.xlane.xlu0 %1843
        %v1845 = vrcp.pop %v1844
        %v1846 = vmul.f32 %v1844, %v1845
        %v1847 = vsub.f32 1.0, %v1846
        %v1848 = vmul.f32 %v1845, %v1847
        %v1849 = vadd.f32 %v1845, %v1848
        %vm1850 = vweird.f32 %v1844
        %vm1851 = vweird.f32 %v1845
        %vm1852 = vmor %vm1850, %vm1851
        %v1853 = vsel %vm1852, %v1845, %v1849
        %v1854 = vand.u32 2147483647, %v1844
        %vm1855 = vcmp.eq.f32.partialorder %v1854, 8.507059e+37
        %v1856 = vand.u32 %v1844, 2147483648
        %v1857 = vor.u32 1.1754944e-38, %v1856
        %v1858 = vsel %vm1855, %v1857, %v1853
        %v1859 = vmul.f32 %v1841, %v1858
        %1860 = vrot.lane.b32.xlu0 %v1601, 112
        %v1861 = vpop.permute.xlu0 %1860
        %v1864 = vsel %vm1069, %v1859, 0
        %1866 = vmatpush.msra.mxu0 0.0
        %1867 = vmatpush.msra.mxu0 0.0
        %1868 = vmatpush.msra.mxu0 0.0
        %1869 = vmatpush.msra.mxu0 0.0
        %1870 = vmatpush.msra.mxu0 0.0
        %1871 = vmatpush.msra.mxu0 0.0
        %1872 = vmatpush.msra.mxu0 0.0
        %1873 = vmatpush.msra.mxu0 0.0
        %1874 = vmatpush.msra.mxu0 0.0
        %1875 = vmatpush.msra.mxu0 0.0
        %1876 = vmatpush.msra.mxu0 0.0
        %1877 = vmatpush.msra.mxu0 0.0
        %1878 = vmatpush.msra.mxu0 0.0
        %1879 = vmatpush.msra.mxu0 0.0
        %1880 = vmatpush.msra.mxu0 0.0
        %1881 = vmatpush.msra.mxu0 %v1861
        %1882 = vmatmul.f32.gmra.mxu0 %v1864
        %v1883 = vpop.f32.mrf.mxu0
        %v1884 = vadd.f32 0.0, %v1883
        %1885 = vdwg.mxu0
        %v1887 = vsel %vm1069, %v1884, 0
        %1889 = vmatpush.msra.mxu0 0.0
        %1890 = vmatpush.msra.mxu0 0.0
        %1891 = vmatpush.msra.mxu0 0.0
        %1892 = vmatpush.msra.mxu0 0.0
        %1893 = vmatpush.msra.mxu0 0.0
        %1894 = vmatpush.msra.mxu0 0.0
        %1895 = vmatpush.msra.mxu0 0.0
        %1896 = vmatpush.msra.mxu0 0.0
        %1897 = vmatpush.msra.mxu0 0.0
        %1898 = vmatpush.msra.mxu0 0.0
        %1899 = vmatpush.msra.mxu0 0.0
        %1900 = vmatpush.msra.mxu0 0.0
        %1901 = vmatpush.msra.mxu0 0.0
        %1902 = vmatpush.msra.mxu0 0.0
        %1903 = vmatpush.msra.mxu0 0.0
        %1904 = vmatpush.msra.mxu0 %v1605
        %1905 = vmatmul.f32.gmra.mxu0 %v1887
        %v1906 = vpop.f32.mrf.mxu0
        %v1907 = vadd.f32 0.0, %v1906
        %1908 = vdwg.mxu0
        %v1909 = vadd.f32 %v1805, %v1907
        %1910 = vrot.lane.b32.xlu0 %v1547, 104
        %v1911 = vpop.permute.xlu0 %1910
        %1912 = vrot.lane.b32.xlu0 %v1574, 104
        %v1913 = vpop.permute.xlu0 %1912
        %v1914 = vsel %vm1069, %v1911, 0
        %v1916 = vsel %vm1069, %v1913, 0
        %1918 = vmatpush.xpose.msra.mxu0 0.0
        %1919 = vmatpush.xpose.msra.mxu0 0.0
        %1920 = vmatpush.xpose.msra.mxu0 0.0
        %1921 = vmatpush.xpose.msra.mxu0 0.0
        %1922 = vmatpush.xpose.msra.mxu0 0.0
        %1923 = vmatpush.xpose.msra.mxu0 0.0
        %1924 = vmatpush.xpose.msra.mxu0 0.0
        %1925 = vmatpush.xpose.msra.mxu0 0.0
        %1926 = vmatpush.xpose.msra.mxu0 0.0
        %1927 = vmatpush.xpose.msra.mxu0 0.0
        %1928 = vmatpush.xpose.msra.mxu0 0.0
        %1929 = vmatpush.xpose.msra.mxu0 0.0
        %1930 = vmatpush.xpose.msra.mxu0 0.0
        %1931 = vmatpush.xpose.msra.mxu0 0.0
        %1932 = vmatpush.xpose.msra.mxu0 0.0
        %1933 = vmatpush.xpose.msra.mxu0 %v1916
        %1934 = vmatmul.f32.gmra.mxu0 %v1914
        %v1935 = vpop.f32.mrf.mxu0
        %v1936 = vadd.f32 %v1521, %v1935
        %1937 = vdwg.mxu0
        %v1938 = vmul.f32 %v1936, 0.17677669
        %v1939 = vsel %vm1069, %v1938, -inf
        %1940 = vmax.xlane.f32.xlu0 %v1939
        %v1941 = vpop.xlane.xlu0 %1940
        %v1942 = vsub.f32 %v1938, %v1941
        %v1943 = vmul.f32 %v1942, 1.442695
        %v1944 = vpow.pop %v1943
        %v1945 = vsel %vm1069, %v1944, 0.0
        %1946 = vadd.xlane.f32.xlu0 %v1945
        %v1947 = vpop.xlane.xlu0 %1946
        %v1948 = vrcp.pop %v1947
        %v1949 = vmul.f32 %v1947, %v1948
        %v1950 = vsub.f32 1.0, %v1949
        %v1951 = vmul.f32 %v1948, %v1950
        %v1952 = vadd.f32 %v1948, %v1951
        %vm1953 = vweird.f32 %v1947
        %vm1954 = vweird.f32 %v1948
        %vm1955 = vmor %vm1953, %vm1954
        %v1956 = vsel %vm1955, %v1948, %v1952
        %v1957 = vand.u32 2147483647, %v1947
        %vm1958 = vcmp.eq.f32.partialorder %v1957, 8.507059e+37
        %v1959 = vand.u32 %v1947, 2147483648
        %v1960 = vor.u32 1.1754944e-38, %v1959
        %v1961 = vsel %vm1958, %v1960, %v1956
        %v1962 = vmul.f32 %v1944, %v1961
        %1963 = vrot.lane.b32.xlu0 %v1601, 104
        %v1964 = vpop.permute.xlu0 %1963
        %v1967 = vsel %vm1069, %v1962, 0
        %1969 = vmatpush.msra.mxu0 0.0
        %1970 = vmatpush.msra.mxu0 0.0
        %1971 = vmatpush.msra.mxu0 0.0
        %1972 = vmatpush.msra.mxu0 0.0
        %1973 = vmatpush.msra.mxu0 0.0
        %1974 = vmatpush.msra.mxu0 0.0
        %1975 = vmatpush.msra.mxu0 0.0
        %1976 = vmatpush.msra.mxu0 0.0
        %1977 = vmatpush.msra.mxu0 0.0
        %1978 = vmatpush.msra.mxu0 0.0
        %1979 = vmatpush.msra.mxu0 0.0
        %1980 = vmatpush.msra.mxu0 0.0
        %1981 = vmatpush.msra.mxu0 0.0
        %1982 = vmatpush.msra.mxu0 0.0
        %1983 = vmatpush.msra.mxu0 0.0
        %1984 = vmatpush.msra.mxu0 %v1964
        %1985 = vmatmul.f32.gmra.mxu0 %v1967
        %v1986 = vpop.f32.mrf.mxu0
        %v1987 = vadd.f32 0.0, %v1986
        %1988 = vdwg.mxu0
        %v1990 = vsel %vm1069, %v1987, 0
        %1992 = vmatpush.msra.mxu0 0.0
        %1993 = vmatpush.msra.mxu0 0.0
        %1994 = vmatpush.msra.mxu0 0.0
        %1995 = vmatpush.msra.mxu0 0.0
        %1996 = vmatpush.msra.mxu0 0.0
        %1997 = vmatpush.msra.mxu0 0.0
        %1998 = vmatpush.msra.mxu0 0.0
        %1999 = vmatpush.msra.mxu0 0.0
        %2000 = vmatpush.msra.mxu0 0.0
        %2001 = vmatpush.msra.mxu0 0.0
        %2002 = vmatpush.msra.mxu0 0.0
        %2003 = vmatpush.msra.mxu0 0.0
        %2004 = vmatpush.msra.mxu0 0.0
        %2005 = vmatpush.msra.mxu0 0.0
        %2006 = vmatpush.msra.mxu0 0.0
        %2007 = vmatpush.msra.mxu0 %v1606
        %2008 = vmatmul.f32.gmra.mxu0 %v1990
        %v2009 = vpop.f32.mrf.mxu0
        %v2010 = vadd.f32 0.0, %v2009
        %2011 = vdwg.mxu0
        %v2012 = vadd.f32 %v1909, %v2010
        %v2013 = vld [vmem:[%s16] sm:$0x1]
        %v2015 = vperm.slane %v2013, 0
        %v2017 = vadd.f32 %v2012, %v2015
        %v2018 = vadd.f32 %v2017, %v1520
        %v2019 = vld [vmem:[%s17] sm:$0x1]
        %v2020 = vld [vmem:[%s18] sm:$0x1]
        %v2021 = vsel %vm993, %v2018, 0.0
        %2022 = vadd.xlane.f32.xlu0 %v2021
        %v2023 = vpop.xlane.xlu0 %2022
        %v2024 = vmul.f32 %v2023, %v1493
        %v2025 = vsub.f32 %v2018, %v2024
        %v2026 = vmul.f32 %v2025, %v2025
        %v2027 = vsel %vm993, %v2026, 0.0
        %2028 = vadd.xlane.f32.xlu0 %v2027
        %v2029 = vpop.xlane.xlu0 %2028
        %v2030 = vmul.f32 %v2029, %v1493
        %v2031 = vadd.f32 %v2030, 1e-05
        %v2032 = vrsqrt.pop %v2031
        %v2033 = vmul.f32 %v2032, %v2031
        %v2034 = vmul.f32 %v2033, %v2032
        %v2035 = vmul.f32 0.5, %v2034
        %v2036 = vsub.f32 1.5, %v2035
        %v2037 = vmul.f32 %v2032, %v2036
        %vm2038 = vweird.f32 %v2031
        %vm2039 = vweird.f32 %v2032
        %vm2040 = vmor %vm2038, %vm2039
        %v2041 = vsel %vm2040, %v2032, %v2037
        %v2042 = vmul.f32 %v2025, %v2041
        %v2044 = vperm.slane %v2019, 0
        %v2046 = vmul.f32 %v2042, %v2044
        %v2048 = vperm.slane %v2020, 0
        %v2050 = vadd.f32 %v2046, %v2048
        %v2051 = vld [vmem:[#allocation19] sm:$0xff]
        %v2052 = vld [vmem:[#allocation19 + $0x8] sm:$0xff]
        %v2053 = vld [vmem:[#allocation19 + $0x10] sm:$0xff]
        %v2054 = vld [vmem:[#allocation19 + $0x18] sm:$0xff]
        %v2055 = vld [vmem:[%s20] sm:$0x1]
        %v2057 = vperm.slane %v2055, 0
        %v2060 = vsel %vm993, %v2050, 0
        %2062 = vmatpush.msra.mxu0 0.0
        %2063 = vmatpush.msra.mxu0 0.0
        %2064 = vmatpush.msra.mxu0 0.0
        %2065 = vmatpush.msra.mxu0 0.0
        %2066 = vmatpush.msra.mxu0 0.0
        %2067 = vmatpush.msra.mxu0 0.0
        %2068 = vmatpush.msra.mxu0 0.0
        %2069 = vmatpush.msra.mxu0 0.0
        %2070 = vmatpush.msra.mxu0 0.0
        %2071 = vmatpush.msra.mxu0 0.0
        %2072 = vmatpush.msra.mxu0 0.0
        %2073 = vmatpush.msra.mxu0 0.0
        %2074 = vmatpush.msra.mxu0 %v2054
        %2075 = vmatpush.msra.mxu0 %v2053
        %2076 = vmatpush.msra.mxu0 %v2052
        %2077 = vmatpush.msra.mxu0 %v2051
        %2078 = vmatmul.f32.gmra.mxu0 %v2060
        %v2079 = vpop.f32.mrf.mxu0
        %v2080 = vadd.f32 %v2057, %v2079
        %2081 = vdwg.mxu0
        %v2082 = vmax.f32 %v2080, 0.0
        %v2083 = vld [vmem:[%s21] sm:$0xff]
        %v2084 = vld [vmem:[%s21 + $0x8] sm:$0xff]
        %v2085 = vld [vmem:[%s21 + $0x10] sm:$0xff]
        %v2086 = vld [vmem:[%s21 + $0x18] sm:$0xff]
        %v2087 = vld [vmem:[%s21 + $0x20] sm:$0xff]
        %v2088 = vld [vmem:[%s21 + $0x28] sm:$0xff]
        %v2089 = vld [vmem:[%s21 + $0x30] sm:$0xff]
        %v2090 = vld [vmem:[%s21 + $0x38] sm:$0xff]
        %v2091 = vld [vmem:[%s22] sm:$0x1]
        %v2093 = vperm.slane %v2091, 0
        %vm2095 = vcmask 523264
        %v2097 = vsel %vm2095, %v2082, 0
        %2099 = vmatpush.msra.mxu0 0.0
        %2100 = vmatpush.msra.mxu0 0.0
        %2101 = vmatpush.msra.mxu0 0.0
        %2102 = vmatpush.msra.mxu0 0.0
        %2103 = vmatpush.msra.mxu0 0.0
        %2104 = vmatpush.msra.mxu0 0.0
        %2105 = vmatpush.msra.mxu0 0.0
        %2106 = vmatpush.msra.mxu0 0.0
        %2107 = vmatpush.msra.mxu0 %v2090
        %2108 = vmatpush.msra.mxu0 %v2089
        %2109 = vmatpush.msra.mxu0 %v2088
        %2110 = vmatpush.msra.mxu0 %v2087
        %2111 = vmatpush.msra.mxu0 %v2086
        %2112 = vmatpush.msra.mxu0 %v2085
        %2113 = vmatpush.msra.mxu0 %v2084
        %2114 = vmatpush.msra.mxu0 %v2083
        %2115 = vmatmul.f32.gmra.mxu0 %v2097
        %v2116 = vpop.f32.mrf.mxu0
        %v2117 = vadd.f32 %v2093, %v2116
        %2118 = vdwg.mxu0
        %v2119 = vadd.f32 %v2117, %v2050
        %v2120 = vld [vmem:[%s23] sm:$0x1]
        %v2121 = vld [vmem:[%s24] sm:$0x1]
        %v2122 = vsel %vm993, %v2119, 0.0
        %2123 = vadd.xlane.f32.xlu0 %v2122
        %v2124 = vpop.xlane.xlu0 %2123
        %v2125 = vmul.f32 %v2124, %v1493
        %v2126 = vsub.f32 %v2119, %v2125
        %v2127 = vmul.f32 %v2126, %v2126
        %v2128 = vsel %vm993, %v2127, 0.0
        %2129 = vadd.xlane.f32.xlu0 %v2128
        %v2130 = vpop.xlane.xlu0 %2129
        %v2131 = vmul.f32 %v2130, %v1493
        %v2132 = vadd.f32 %v2131, 1e-05
        %v2133 = vrsqrt.pop %v2132
        %v2134 = vmul.f32 %v2133, %v2132
        %v2135 = vmul.f32 %v2134, %v2133
        %v2136 = vmul.f32 0.5, %v2135
        %v2137 = vsub.f32 1.5, %v2136
        %v2138 = vmul.f32 %v2133, %v2137
        %vm2139 = vweird.f32 %v2132
        %vm2140 = vweird.f32 %v2133
        %vm2141 = vmor %vm2139, %vm2140
        %v2142 = vsel %vm2141, %v2133, %v2138
        %v2143 = vmul.f32 %v2126, %v2142
        %v2145 = vperm.slane %v2120, 0
        %v2147 = vmul.f32 %v2143, %v2145
        %v2149 = vperm.slane %v2121, 0
        %v2151 = vadd.f32 %v2147, %v2149
        %2152 = vst.msk [vmem:[%s984] sm:$0xff] %vm993, %v2151
        %s2153 = sand.u32 %s597, 1
        %s2154 = scalar_lea.sflag [#allocation4], %s2153
        %s2155 = sand.u32 %s597, 1
        %s2156 = smul.addr %s2155, 8
        %s2157 = scalar_lea.vmem [#allocation20], %s2156
        // Predicated region
        $region165: #{tpu_custom_call.1} parent=119 // pred_check
          %p2158 = pneg %p607
        $region166: #{tpu_custom_call.1} parent=119 // pred_check_branch
          %2160 = sbr.rel (%p2158) target = $region168
        $region167: #{tpu_custom_call.1} parent=119 // pred_region
          %2162 = vsyncadd %s2154, 0
          %s2163 = smul.addr %s49, 8
          %s2164 = scalar_lea.hbm %s25, %s2163
          %s2166 = sshll.u32 %s2157, 4
          %s2167 = int_to_ptr.vmem [resolvable:$true] %s2166
          %s2168 = sshll.u32 %s2164, 4
          %s2169 = int_to_ptr.hbm [resolvable:$true] %s2168
          %2171 = dma.vmem_to_hbm [thread:$0]  %s2167, 128, %s2169, %s2154
        $region168: #{tpu_custom_call.1} parent=119 // pred_fallthru
          _
      $region120: #{tpu_custom_call.1} parent=5 // pred_fallthru
        _
      %p2172 = scmp.le.s32.totalorder 2, %s44
      // Predicated region
      $region169: #{tpu_custom_call.1} parent=5 // pred_check
        %p2173 = pneg %p2172
      $region170: #{tpu_custom_call.1} parent=5 // pred_check_branch
        %2175 = sbr.rel (%p2173) target = $region172
      $region171: #{tpu_custom_call.1} parent=5 // pred_region
        %s2176 = ssub.s32 %s44, 2
        // Predicated region
        $region173: #{tpu_custom_call.1} parent=171 // pred_check
          %p2177 = pneg %p613
        $region174: #{tpu_custom_call.1} parent=171 // pred_check_branch
          %2179 = sbr.rel (%p2177) target = $region176
        $region175: #{tpu_custom_call.1} parent=171 // pred_region
          %s2180 = sand.u32 %s598, 1
          %s2181 = scalar_lea.sflag [#allocation4], %s2180
          %s2182 = sand.u32 %s598, 1
          %s2183 = smul.addr %s2182, 8
          %s2184 = scalar_lea.vmem [#allocation20], %s2183
          %2186 = dma.done %s2181, 128
        $region176: #{tpu_custom_call.1} parent=171 // pred_fallthru
          _
      $region172: #{tpu_custom_call.1} parent=5 // pred_fallthru
        _
    $region6: #{tpu_custom_call.1} parent=1 // loop_footer
      %s48 = sadd.s32 1, %s44
    $region7: #{tpu_custom_call.1} parent=1 // loop_footer_branch
      %43 = sbr.rel target = $region3
    $region8: #{tpu_custom_call.1} parent=1 // loop_exit
      _
    %2187 = vsyncpa [#allocation3], 1
    %s2188 = scalar_lea.sflag [#allocation3], 1
    %2189 = vsyncpa %s2188, 1
    %2190 = vsyncpa [#allocation6], 1
    %s2191 = scalar_lea.sflag [#allocation6], 1
    %2192 = vsyncpa %s2191, 1
    %2193 = vsyncpa [#allocation9], 1
    %2194 = vsyncpa [#allocation12], 1
    %2195 = vsyncpa [#allocation15], 1
    %2196 = vsyncpa [#allocation18], 1
    %2197 = vsyncpa [#allocation4], 1
    %s2198 = scalar_lea.sflag [#allocation4], 1
    %2199 = vsyncpa %s2198, 1

</llo_original>
